<compile_context>
chip_gen: v5e
topology: v5e:2x2
jax: 0.10.0
libtpu: 0.0.40
codegen_flags: <defaults>
</compile_context>

<pallas_src>
import functools

import jax
import jax.numpy as jnp
from jax import lax
from jax.experimental import pallas as pl
from jax.experimental.pallas import tpu as pltpu


def _layernorm(x, g, b, eps=1e-5):
    mu = jnp.mean(x, axis=-1, keepdims=True)
    xc = x - mu
    var = jnp.mean(xc * xc, axis=-1, keepdims=True)
    return xc * lax.rsqrt(var + eps) * g + b


def _vmem_limit_bytes():
    # v7x: 64 MiB physical -> ~48 MiB budget; v5e/v6e: 128 MiB -> 96 MiB (capped at 100 MiB).
    try:
        cap = pltpu.get_tpu_info().vmem_capacity_bytes
        return min(int(0.75 * cap), 100 * 1024 * 1024)
    except Exception:
        return 48 * 1024 * 1024


# ---------------------------------------------------------------------------
# Fused kernel: all encoder layers + final LN + mean-pool + fc.
# Grid = (batch_tiles, L): batch tiles parallel, L arbitrary (residual stream
# kept in a VMEM scratch across layers; per-layer weights streamed).
# ---------------------------------------------------------------------------
def stack_kernel(x_ref, wqkv_ref, wo_ref, w1_ref, w2_ref, pvec_ref,
                 encln_ref, wfc_ref, bfc_ref, o_ref, x_scr,
                 *, num_heads, bt):
    l = pl.program_id(1)
    last = pl.num_programs(1) - 1

    R, E = x_scr.shape                      # R = bt * S rows per program
    S = R // bt
    H = num_heads
    dh = E // H
    Hff = w1_ref.shape[-1]

    # Layer 0: load the embedded batch tile into the resident residual-stream scratch,
    # flattened to (R, E) so every matmul below gets R rows.
    @pl.when(l == 0)
    def _():
        x_scr[...] = x_ref[...].reshape(R, E)

    x = x_scr[...]                          # (R, E) f32 residual stream
    xb = x.astype(jnp.bfloat16)

    # Packed per-layer vectors (one streamed (8, Wp) block per layer).
    pv = pvec_ref[0]
    bqkv = pv[0:1, :3 * E]
    bo   = pv[1:2, :E]
    ln1g = pv[2:3, :E]
    ln1b = pv[3:4, :E]
    b1   = pv[4:5, :Hff]
    b2   = pv[5:6, :E]
    ln2g = pv[6:7, :E]
    ln2b = pv[7:8, :E]

    # --- self-attention -----------------------------------------------------
    # Fused QKV projection: one (R, E) x (E, 3E) MXU matmul.  The 1/sqrt(dh) softmax
    # scale is pre-folded into the q columns of wqkv (zero runtime cost).
    qkv = jnp.dot(xb, wqkv_ref[0], preferred_element_type=jnp.float32) + bqkv
    qkv_b = qkv.astype(jnp.bfloat16)
    q2, k2, v2 = qkv_b[:, :E], qkv_b[:, E:2 * E], qkv_b[:, 2 * E:]   # E-aligned splits

    def to_heads(m):                        # (R, E) -> (bt*H, S, dh) head-batched view
        return jnp.stack([m[b * S:(b + 1) * S, h * dh:(h + 1) * dh]
                          for b in range(bt) for h in range(H)], axis=0)

    q3, k3, v3 = to_heads(q2), to_heads(k2), to_heads(v2)

    scores = lax.dot_general(q3, k3, (((2,), (2,)), ((0,), (0,))),
                             preferred_element_type=jnp.float32)      # (bt*H, S, S)
    scores = scores - jnp.max(scores, axis=-1, keepdims=True)
    p = jnp.exp(scores)                                               # f32 softmax math
    p = p * pl.reciprocal(jnp.sum(p, axis=-1, keepdims=True), approx=True)

    ctx = lax.dot_general(p.astype(jnp.bfloat16), v3, (((2,), (1,)), ((0,), (0,))),
                          preferred_element_type=jnp.float32)         # (bt*H, S, dh)

    # Concatenate heads back to (R, E): the output projection then contracts over the
    # full E = H*dh depth in a single MXU matmul (fused head sum, no per-head adds).
    ctx2d = jnp.concatenate(
        [jnp.concatenate([ctx[b * H + h] for h in range(H)], axis=-1)
         for b in range(bt)], axis=0)                                 # (R, E) f32

    attn = jnp.dot(ctx2d.astype(jnp.bfloat16), wo_ref[0],
                   preferred_element_type=jnp.float32) + bo           # (R, E)

    x1 = _layernorm(x + attn, ln1g, ln1b)                             # post-LN

    # --- feed-forward (full-depth (R,E)x(E,Hff) / (R,Hff)x(Hff,E) matmuls) ---
    # TODO(synk): for realistic (E, Hff) stream w1/w2 over a K grid axis /
    # pltpu.emit_pipeline so double-buffered FFN weights fit v7x's 64 MiB VMEM.
    h1 = jnp.dot(x1.astype(jnp.bfloat16), w1_ref[0],
                 preferred_element_type=jnp.float32) + b1
    h1 = jnp.maximum(h1, 0.0)                                         # ReLU
    h2 = jnp.dot(h1.astype(jnp.bfloat16), w2_ref[0],
                 preferred_element_type=jnp.float32) + b2
    x2 = _layernorm(x1 + h2, ln2g, ln2b)

    x_scr[...] = x2                                                   # stays in VMEM

    # Last layer: final encoder LayerNorm + mean over S (== mean(dim=1)) + fc.
    @pl.when(l == last)
    def _():
        xn = _layernorm(x2, encln_ref[0:1, :], encln_ref[1:2, :])     # (R, E)
        pooled = jnp.mean(xn.reshape(bt, S, E), axis=1)               # (bt, E)
        logits = jnp.dot(pooled.astype(jnp.bfloat16), wfc_ref[...],
                         preferred_element_type=jnp.float32) + bfc_ref[...]   # (bt, Cpad)
        o_ref[0] = logits


def encoder_stack(x, p, num_heads, batch_tile=None):
    B, S, E = x.shape
    H = num_heads
    assert E % H == 0, "embedding_dim must be divisible by num_heads"
    L = p["wqkv"].shape[0]
    Hff = p["w1"].shape[-1]
    Wp = p["pvec"].shape[-1]

    C = p["wfc"].shape[-1]
    Cpad = ((C + 127) // 128) * 128                     # lane-dense fc output slab
    wfc = jnp.pad(p["wfc"], ((0, 0), (0, Cpad - C)))
    bfc = jnp.pad(p["bfc"], ((0, 0), (0, Cpad - C)))

    # Fold batch into the matmul row dimension: Bt*S rows per program (aim ~128-256 rows).
    if batch_tile is None:
        batch_tile = B if B * S <= 256 else max(1, 256 // S)
    Bt = max(1, min(batch_tile, B))
    while B % Bt:
        Bt -= 1
    nb = B // Bt

    kernel = functools.partial(stack_kernel, num_heads=H, bt=Bt)

    out = pl.pallas_call(
        kernel,
        out_shape=jax.ShapeDtypeStruct((nb, Bt, Cpad), jnp.float32),
        grid=(nb, L),
        in_specs=[
            pl.BlockSpec((Bt, S, E), lambda bi, l: (bi, 0, 0)),        # embedded tokens
            pl.BlockSpec((1, E, 3 * E), lambda bi, l: (l, 0, 0)),      # wqkv   (streamed / layer)
            pl.BlockSpec((1, E, E), lambda bi, l: (l, 0, 0)),          # wo     (streamed / layer)
            pl.BlockSpec((1, E, Hff), lambda bi, l: (l, 0, 0)),        # w1     (streamed / layer)
            pl.BlockSpec((1, Hff, E), lambda bi, l: (l, 0, 0)),        # w2     (streamed / layer)
            pl.BlockSpec((1, 8, Wp), lambda bi, l: (l, 0, 0)),         # packed biases / LN vecs
            pl.BlockSpec((2, E), lambda bi, l: (0, 0)),                # final encoder LN g/b
            pl.BlockSpec((E, Cpad), lambda bi, l: (0, 0)),             # fc weight (resident)
            pl.BlockSpec((1, Cpad), lambda bi, l: (0, 0)),             # fc bias   (resident)
        ],
        out_specs=pl.BlockSpec((1, Bt, Cpad), lambda bi, l: (bi, 0, 0)),
        scratch_shapes=[pltpu.VMEM((Bt * S, E), jnp.float32)],         # resident residual stream
        compiler_params=pltpu.CompilerParams(
            dimension_semantics=("parallel", "arbitrary"),
            vmem_limit_bytes=_vmem_limit_bytes(),
        ),
    )(x, p["wqkv"], p["wo"], p["w1"], p["w2"], p["pvec"], p["encln"], wfc, bfc)

    return out.reshape(B, Cpad)[:, :C]                  # (B, num_classes)


# ---------------------------------------------------------------------------
# Full forward (glue in plain JAX: embedding gather).
# TODO(synk): fuse the embedding gather into the kernel via PrefetchScalarGridSpec
# (tokens as scalar prefetch) + pl.Element row gather to avoid the (B,S,E) HBM
# round trip (largest relative win on v5e's ~0.8 TB/s HBM).
# ---------------------------------------------------------------------------
def transformer_encoder_forward(tokens, params, num_heads):
    x = params["embedding"][tokens]                     # (B, S, E) f32
    return encoder_stack(x, params, num_heads)


def init_params(key, vocab_size, E, num_heads, hidden_dim, num_layers, num_classes):
    H, dh, L, Hff = num_heads, E // num_heads, num_layers, hidden_dim
    keys = iter(jax.random.split(key, 8))

    def nrmf(shape, scale=0.02):
        return scale * jax.random.normal(next(keys), shape, dtype=jnp.float32)

    def nrm(shape, scale=0.02):
        # Matmul weights stored bf16 (MXU-native, intentional precision choice);
        # biases / LN params stay f32.
        return nrmf(shape, scale).astype(jnp.bfloat16)

    # Fused QKV projection weight (E, 3E): columns ordered [q | k | v], head-major within
    # each third.  The 1/sqrt(dh) softmax scale is folded into the q columns (and would be
    # folded into the q bias rows of pvec if they were nonzero) -> zero runtime cost.
    wqkv_f = nrmf((L, E, 3 * E))
    wqkv_f = wqkv_f.at[:, :, :E].multiply(1.0 / (dh ** 0.5))
    wqkv = wqkv_f.astype(jnp.bfloat16)

    # Packed per-layer small vectors, one streamed (8, Wp) block per layer:
    #   row 0: bqkv (3E)   row 1: bo (E)     row 2: ln1_gamma (E)  row 3: ln1_beta (E)
    #   row 4: b1  (Hff)   row 5: b2 (E)     row 6: ln2_gamma (E)  row 7: ln2_beta (E)
    Wp = ((max(3 * E, Hff, E) + 127) // 128) * 128
    pvec = jnp.zeros((L, 8, Wp), jnp.float32)
    pvec = pvec.at[:, 2, :E].set(1.0)                   # ln1 gamma
    pvec = pvec.at[:, 6, :E].set(1.0)                   # ln2 gamma

    encln = jnp.concatenate([jnp.ones((1, E), jnp.float32),
                             jnp.zeros((1, E), jnp.float32)], axis=0)   # final encoder LN g/b

    return {
        "embedding": jax.random.normal(next(keys), (vocab_size, E), dtype=jnp.float32),
        "wqkv": wqkv,                                   # (L, E, 3E)  bf16 (q cols pre-scaled)
        "wo":   nrm((L, E, E)),                         # (L, E, E)   bf16
        "w1":   nrm((L, E, Hff)),                       # (L, E, Hff) bf16
        "w2":   nrm((L, Hff, E)),                       # (L, Hff, E) bf16
        "pvec": pvec,                                   # (L, 8, Wp)  f32 packed vectors
        "encln": encln,                                 # (2, E)      f32
        "wfc":  nrm((E, num_classes)),                  # (E, C)      bf16
        "bfc":  jnp.zeros((1, num_classes), jnp.float32),
    }


if __name__ == "__main__":
    # Small, module-consistent shapes.
    vocab_size, embedding_dim, num_heads, hidden_dim, num_layers, num_classes = 50, 32, 4, 64, 2, 5
    B, S = 2, 8

    key = jax.random.PRNGKey(0)
    k_tok, k_par = jax.random.split(key)
    tokens = jax.random.randint(k_tok, (B, S), 0, vocab_size, dtype=jnp.int32)
    params = init_params(k_par, vocab_size, embedding_dim, num_heads,
                         hidden_dim, num_layers, num_classes)

    fwd = jax.jit(functools.partial(transformer_encoder_forward, num_heads=num_heads))
    out = fwd(tokens, params)                           # (B, num_classes)
    jax.block_until_ready(out)
    assert out.shape == (B, num_classes)
    assert bool(jnp.all(jnp.isfinite(out)))
    print("KERNEL_OK")
</pallas_src>

<mosaic_0001>
module attributes {stable_mosaic.version = 11 : i64} {
  func.func @stack_kernel(%arg0: i32, %arg1: i32, %arg2: memref<2x8x32xf32, #tpu.memory_space<vmem>>, %arg3: memref<1x32x96xbf16, #tpu.memory_space<vmem>>, %arg4: memref<1x32x32xbf16, #tpu.memory_space<vmem>>, %arg5: memref<1x32x64xbf16, #tpu.memory_space<vmem>>, %arg6: memref<1x64x32xbf16, #tpu.memory_space<vmem>>, %arg7: memref<1x8x128xf32, #tpu.memory_space<vmem>>, %arg8: memref<2x32xf32, #tpu.memory_space<vmem>>, %arg9: memref<32x128xbf16, #tpu.memory_space<vmem>>, %arg10: memref<1x128xf32, #tpu.memory_space<vmem>>, %arg11: memref<1x2x128xf32, #tpu.memory_space<vmem>>, %arg12: memref<16x32xf32, #tpu.memory_space<vmem>>) attributes {dimension_semantics = [#tpu.dimension_semantics<parallel>, #tpu.dimension_semantics<arbitrary>], iteration_bounds = array<i64: 1, 2>, scalar_prefetch = 0 : i64, scratch_operands = 1 : i64, tpu.core_type = #tpu.core_type<tc>, window_params = [{transform_indices = @transform_0, window_bounds = array<i64: 2, 8, 32>}, {transform_indices = @transform_1, window_bounds = array<i64: 1, 32, 96>}, {transform_indices = @transform_2, window_bounds = array<i64: 1, 32, 32>}, {transform_indices = @transform_3, window_bounds = array<i64: 1, 32, 64>}, {transform_indices = @transform_4, window_bounds = array<i64: 1, 64, 32>}, {transform_indices = @transform_5, window_bounds = array<i64: 1, 8, 128>}, {pipeline_mode = #tpu.pipeline_mode<synchronous>, transform_indices = @transform_6, window_bounds = array<i64: 2, 32>}, {pipeline_mode = #tpu.pipeline_mode<synchronous>, transform_indices = @transform_7, window_bounds = array<i64: 32, 128>}, {pipeline_mode = #tpu.pipeline_mode<synchronous>, transform_indices = @transform_8, window_bounds = array<i64: 1, 128>}, {transform_indices = @transform_9, window_bounds = array<i64: 1, 2, 128>}]} {
    %c0_i32 = arith.constant 0 : i32
    %0 = arith.cmpi eq, %arg1, %c0_i32 : i32
    %1 = arith.extui %0 : i1 to i32
    %c0_i32_0 = arith.constant 0 : i32
    %2 = arith.cmpi ne, %1, %c0_i32_0 : i32
    scf.if %2 {
      %c0_38 = arith.constant 0 : index
      %c0_39 = arith.constant 0 : index
      %c0_40 = arith.constant 0 : index
      %173 = vector.load %arg2[%c0_38, %c0_39, %c0_40] : memref<2x8x32xf32, #tpu.memory_space<vmem>>, vector<2x8x32xf32>
      %174 = vector.shape_cast %173 : vector<2x8x32xf32> to vector<16x32xf32>
      %c0_41 = arith.constant 0 : index
      %c0_42 = arith.constant 0 : index
      %175 = vector.load %arg12[%c0_41, %c0_42] : memref<16x32xf32, #tpu.memory_space<vmem>>, vector<16x32xf32>
      tpu.vector_store %arg12[%c0_41, %c0_42], %174 {strides = array<i32>} : memref<16x32xf32, #tpu.memory_space<vmem>>, vector<16x32xf32>,
    } else {
    }
    %c0 = arith.constant 0 : index
    %c0_1 = arith.constant 0 : index
    %3 = vector.load %arg12[%c0, %c0_1] : memref<16x32xf32, #tpu.memory_space<vmem>>, vector<16x32xf32>
    %4 = arith.truncf %3 : vector<16x32xf32> to vector<16x32xbf16>
    %c0_2 = arith.constant 0 : index
    %c0_3 = arith.constant 0 : index
    %c0_4 = arith.constant 0 : index
    %5 = vector.load %arg7[%c0_2, %c0_3, %c0_4] : memref<1x8x128xf32, #tpu.memory_space<vmem>>, vector<1x8x128xf32>
    %6 = vector.shape_cast %5 : vector<1x8x128xf32> to vector<8x128xf32>
    %7 = vector.extract_strided_slice %6 {offsets = [0, 0], sizes = [1, 96], strides = [1, 1]} : vector<8x128xf32> to vector<1x96xf32>
    %8 = vector.extract_strided_slice %6 {offsets = [1, 0], sizes = [1, 32], strides = [1, 1]} : vector<8x128xf32> to vector<1x32xf32>
    %9 = vector.extract_strided_slice %6 {offsets = [2, 0], sizes = [1, 32], strides = [1, 1]} : vector<8x128xf32> to vector<1x32xf32>
    %10 = vector.extract_strided_slice %6 {offsets = [3, 0], sizes = [1, 32], strides = [1, 1]} : vector<8x128xf32> to vector<1x32xf32>
    %11 = vector.extract_strided_slice %6 {offsets = [4, 0], sizes = [1, 64], strides = [1, 1]} : vector<8x128xf32> to vector<1x64xf32>
    %12 = vector.extract_strided_slice %6 {offsets = [5, 0], sizes = [1, 32], strides = [1, 1]} : vector<8x128xf32> to vector<1x32xf32>
    %13 = vector.extract_strided_slice %6 {offsets = [6, 0], sizes = [1, 32], strides = [1, 1]} : vector<8x128xf32> to vector<1x32xf32>
    %14 = vector.extract_strided_slice %6 {offsets = [7, 0], sizes = [1, 32], strides = [1, 1]} : vector<8x128xf32> to vector<1x32xf32>
    %c0_5 = arith.constant 0 : index
    %c0_6 = arith.constant 0 : index
    %c0_7 = arith.constant 0 : index
    %15 = vector.load %arg3[%c0_5, %c0_6, %c0_7] : memref<1x32x96xbf16, #tpu.memory_space<vmem>>, vector<1x32x96xbf16>
    %16 = vector.shape_cast %15 : vector<1x32x96xbf16> to vector<32x96xbf16>
    %cst = arith.constant dense<0.000000e+00> : vector<16x96xf32>
    %17 = tpu.matmul %4, %16, %cst {dimension_numbers = #tpu.dot_dimension_numbers<[1], [0], [0], [1], [0, 0, 1, 1], [], []>} : vector<16x32xbf16>, vector<32x96xbf16>, vector<16x96xf32> -> vector<16x96xf32>
    %18 = vector.broadcast %7 : vector<1x96xf32> to vector<16x96xf32>
    %19 = arith.addf %17, %18 : vector<16x96xf32>
    %20 = arith.truncf %19 : vector<16x96xf32> to vector<16x96xbf16>
    %21 = vector.extract_strided_slice %20 {offsets = [0, 0], sizes = [16, 32], strides = [1, 1]} : vector<16x96xbf16> to vector<16x32xbf16>
    %22 = vector.extract_strided_slice %20 {offsets = [0, 32], sizes = [16, 32], strides = [1, 1]} : vector<16x96xbf16> to vector<16x32xbf16>
    %23 = vector.extract_strided_slice %20 {offsets = [0, 64], sizes = [16, 32], strides = [1, 1]} : vector<16x96xbf16> to vector<16x32xbf16>
    %24 = vector.extract_strided_slice %21 {offsets = [0, 0], sizes = [8, 8], strides = [1, 1]} : vector<16x32xbf16> to vector<8x8xbf16>
    %25 = vector.extract_strided_slice %21 {offsets = [0, 8], sizes = [8, 8], strides = [1, 1]} : vector<16x32xbf16> to vector<8x8xbf16>
    %26 = vector.extract_strided_slice %21 {offsets = [0, 16], sizes = [8, 8], strides = [1, 1]} : vector<16x32xbf16> to vector<8x8xbf16>
    %27 = vector.extract_strided_slice %21 {offsets = [0, 24], sizes = [8, 8], strides = [1, 1]} : vector<16x32xbf16> to vector<8x8xbf16>
    %28 = vector.extract_strided_slice %21 {offsets = [8, 0], sizes = [8, 8], strides = [1, 1]} : vector<16x32xbf16> to vector<8x8xbf16>
    %29 = vector.extract_strided_slice %21 {offsets = [8, 8], sizes = [8, 8], strides = [1, 1]} : vector<16x32xbf16> to vector<8x8xbf16>
    %30 = vector.extract_strided_slice %21 {offsets = [8, 16], sizes = [8, 8], strides = [1, 1]} : vector<16x32xbf16> to vector<8x8xbf16>
    %31 = vector.extract_strided_slice %21 {offsets = [8, 24], sizes = [8, 8], strides = [1, 1]} : vector<16x32xbf16> to vector<8x8xbf16>
    %32 = vector.shape_cast %24 : vector<8x8xbf16> to vector<1x8x8xbf16>
    %33 = vector.shape_cast %25 : vector<8x8xbf16> to vector<1x8x8xbf16>
    %34 = vector.shape_cast %26 : vector<8x8xbf16> to vector<1x8x8xbf16>
    %35 = vector.shape_cast %27 : vector<8x8xbf16> to vector<1x8x8xbf16>
    %36 = vector.shape_cast %28 : vector<8x8xbf16> to vector<1x8x8xbf16>
    %37 = vector.shape_cast %29 : vector<8x8xbf16> to vector<1x8x8xbf16>
    %38 = vector.shape_cast %30 : vector<8x8xbf16> to vector<1x8x8xbf16>
    %39 = vector.shape_cast %31 : vector<8x8xbf16> to vector<1x8x8xbf16>
    %40 = tpu.concatenate %32, %33, %34, %35, %36, %37, %38, %39 in 0 : vector<1x8x8xbf16>, vector<1x8x8xbf16>, vector<1x8x8xbf16>, vector<1x8x8xbf16>, vector<1x8x8xbf16>, vector<1x8x8xbf16>, vector<1x8x8xbf16>, vector<1x8x8xbf16> -> vector<8x8x8xbf16>
    %41 = vector.extract_strided_slice %22 {offsets = [0, 0], sizes = [8, 8], strides = [1, 1]} : vector<16x32xbf16> to vector<8x8xbf16>
    %42 = vector.extract_strided_slice %22 {offsets = [0, 8], sizes = [8, 8], strides = [1, 1]} : vector<16x32xbf16> to vector<8x8xbf16>
    %43 = vector.extract_strided_slice %22 {offsets = [0, 16], sizes = [8, 8], strides = [1, 1]} : vector<16x32xbf16> to vector<8x8xbf16>
    %44 = vector.extract_strided_slice %22 {offsets = [0, 24], sizes = [8, 8], strides = [1, 1]} : vector<16x32xbf16> to vector<8x8xbf16>
    %45 = vector.extract_strided_slice %22 {offsets = [8, 0], sizes = [8, 8], strides = [1, 1]} : vector<16x32xbf16> to vector<8x8xbf16>
    %46 = vector.extract_strided_slice %22 {offsets = [8, 8], sizes = [8, 8], strides = [1, 1]} : vector<16x32xbf16> to vector<8x8xbf16>
    %47 = vector.extract_strided_slice %22 {offsets = [8, 16], sizes = [8, 8], strides = [1, 1]} : vector<16x32xbf16> to vector<8x8xbf16>
    %48 = vector.extract_strided_slice %22 {offsets = [8, 24], sizes = [8, 8], strides = [1, 1]} : vector<16x32xbf16> to vector<8x8xbf16>
    %49 = vector.shape_cast %41 : vector<8x8xbf16> to vector<1x8x8xbf16>
    %50 = vector.shape_cast %42 : vector<8x8xbf16> to vector<1x8x8xbf16>
    %51 = vector.shape_cast %43 : vector<8x8xbf16> to vector<1x8x8xbf16>
    %52 = vector.shape_cast %44 : vector<8x8xbf16> to vector<1x8x8xbf16>
    %53 = vector.shape_cast %45 : vector<8x8xbf16> to vector<1x8x8xbf16>
    %54 = vector.shape_cast %46 : vector<8x8xbf16> to vector<1x8x8xbf16>
    %55 = vector.shape_cast %47 : vector<8x8xbf16> to vector<1x8x8xbf16>
    %56 = vector.shape_cast %48 : vector<8x8xbf16> to vector<1x8x8xbf16>
    %57 = tpu.concatenate %49, %50, %51, %52, %53, %54, %55, %56 in 0 : vector<1x8x8xbf16>, vector<1x8x8xbf16>, vector<1x8x8xbf16>, vector<1x8x8xbf16>, vector<1x8x8xbf16>, vector<1x8x8xbf16>, vector<1x8x8xbf16>, vector<1x8x8xbf16> -> vector<8x8x8xbf16>
    %58 = vector.extract_strided_slice %23 {offsets = [0, 0], sizes = [8, 8], strides = [1, 1]} : vector<16x32xbf16> to vector<8x8xbf16>
    %59 = vector.extract_strided_slice %23 {offsets = [0, 8], sizes = [8, 8], strides = [1, 1]} : vector<16x32xbf16> to vector<8x8xbf16>
    %60 = vector.extract_strided_slice %23 {offsets = [0, 16], sizes = [8, 8], strides = [1, 1]} : vector<16x32xbf16> to vector<8x8xbf16>
    %61 = vector.extract_strided_slice %23 {offsets = [0, 24], sizes = [8, 8], strides = [1, 1]} : vector<16x32xbf16> to vector<8x8xbf16>
    %62 = vector.extract_strided_slice %23 {offsets = [8, 0], sizes = [8, 8], strides = [1, 1]} : vector<16x32xbf16> to vector<8x8xbf16>
    %63 = vector.extract_strided_slice %23 {offsets = [8, 8], sizes = [8, 8], strides = [1, 1]} : vector<16x32xbf16> to vector<8x8xbf16>
    %64 = vector.extract_strided_slice %23 {offsets = [8, 16], sizes = [8, 8], strides = [1, 1]} : vector<16x32xbf16> to vector<8x8xbf16>
    %65 = vector.extract_strided_slice %23 {offsets = [8, 24], sizes = [8, 8], strides = [1, 1]} : vector<16x32xbf16> to vector<8x8xbf16>
    %66 = vector.shape_cast %58 : vector<8x8xbf16> to vector<1x8x8xbf16>
    %67 = vector.shape_cast %59 : vector<8x8xbf16> to vector<1x8x8xbf16>
    %68 = vector.shape_cast %60 : vector<8x8xbf16> to vector<1x8x8xbf16>
    %69 = vector.shape_cast %61 : vector<8x8xbf16> to vector<1x8x8xbf16>
    %70 = vector.shape_cast %62 : vector<8x8xbf16> to vector<1x8x8xbf16>
    %71 = vector.shape_cast %63 : vector<8x8xbf16> to vector<1x8x8xbf16>
    %72 = vector.shape_cast %64 : vector<8x8xbf16> to vector<1x8x8xbf16>
    %73 = vector.shape_cast %65 : vector<8x8xbf16> to vector<1x8x8xbf16>
    %74 = tpu.concatenate %66, %67, %68, %69, %70, %71, %72, %73 in 0 : vector<1x8x8xbf16>, vector<1x8x8xbf16>, vector<1x8x8xbf16>, vector<1x8x8xbf16>, vector<1x8x8xbf16>, vector<1x8x8xbf16>, vector<1x8x8xbf16>, vector<1x8x8xbf16> -> vector<8x8x8xbf16>
    %cst_8 = arith.constant dense<0.000000e+00> : vector<8x8x8xf32>
    %75 = tpu.matmul %40, %57, %cst_8 {dimension_numbers = #tpu.dot_dimension_numbers<[2], [2], [1], [1], [0, 0, 0, 1, 1, 1], [0], [0]>} : vector<8x8x8xbf16>, vector<8x8x8xbf16>, vector<8x8x8xf32> -> vector<8x8x8xf32>
    %cst_9 = arith.constant dense<0xFF800000> : vector<8x8xf32>
    %76 = vector.multi_reduction <maximumf>, %75, %cst_9 [2] : vector<8x8x8xf32> to vector<8x8xf32>
    %77 = vector.shape_cast %76 : vector<8x8xf32> to vector<8x8x1xf32>
    %78 = vector.broadcast %77 : vector<8x8x1xf32> to vector<8x8x8xf32>
    %79 = arith.subf %75, %78 : vector<8x8x8xf32>
    %80 = math.exp %79 : vector<8x8x8xf32>
    %cst_10 = arith.constant dense<0.000000e+00> : vector<8x8xf32>
    %81 = vector.multi_reduction <add>, %80, %cst_10 [2] : vector<8x8x8xf32> to vector<8x8xf32>
    %82 = vector.shape_cast %81 : vector<8x8xf32> to vector<8x8x1xf32>
    %83 = tpu.reciprocal %82 {approx = true} : vector<8x8x1xf32> -> vector<8x8x1xf32>
    %84 = vector.broadcast %83 : vector<8x8x1xf32> to vector<8x8x8xf32>
    %85 = arith.mulf %80, %84 : vector<8x8x8xf32>
    %86 = arith.truncf %85 : vector<8x8x8xf32> to vector<8x8x8xbf16>
    %cst_11 = arith.constant dense<0.000000e+00> : vector<8x8x8xf32>
    %87 = tpu.matmul %86, %74, %cst_11 {dimension_numbers = #tpu.dot_dimension_numbers<[2], [1], [1], [2], [0, 0, 0, 1, 1, 2], [0], [0]>} : vector<8x8x8xbf16>, vector<8x8x8xbf16>, vector<8x8x8xf32> -> vector<8x8x8xf32>
    %88 = vector.extract_strided_slice %87 {offsets = [0, 0, 0], sizes = [1, 8, 8], strides = [1, 1, 1]} : vector<8x8x8xf32> to vector<1x8x8xf32>
    %89 = vector.shape_cast %88 : vector<1x8x8xf32> to vector<8x8xf32>
    %90 = vector.extract_strided_slice %87 {offsets = [1, 0, 0], sizes = [1, 8, 8], strides = [1, 1, 1]} : vector<8x8x8xf32> to vector<1x8x8xf32>
    %91 = vector.shape_cast %90 : vector<1x8x8xf32> to vector<8x8xf32>
    %92 = vector.extract_strided_slice %87 {offsets = [2, 0, 0], sizes = [1, 8, 8], strides = [1, 1, 1]} : vector<8x8x8xf32> to vector<1x8x8xf32>
    %93 = vector.shape_cast %92 : vector<1x8x8xf32> to vector<8x8xf32>
    %94 = vector.extract_strided_slice %87 {offsets = [3, 0, 0], sizes = [1, 8, 8], strides = [1, 1, 1]} : vector<8x8x8xf32> to vector<1x8x8xf32>
    %95 = vector.shape_cast %94 : vector<1x8x8xf32> to vector<8x8xf32>
    %96 = tpu.concatenate %89, %91, %93, %95 in 1 : vector<8x8xf32>, vector<8x8xf32>, vector<8x8xf32>, vector<8x8xf32> -> vector<8x32xf32>
    %97 = vector.extract_strided_slice %87 {offsets = [4, 0, 0], sizes = [1, 8, 8], strides = [1, 1, 1]} : vector<8x8x8xf32> to vector<1x8x8xf32>
    %98 = vector.shape_cast %97 : vector<1x8x8xf32> to vector<8x8xf32>
    %99 = vector.extract_strided_slice %87 {offsets = [5, 0, 0], sizes = [1, 8, 8], strides = [1, 1, 1]} : vector<8x8x8xf32> to vector<1x8x8xf32>
    %100 = vector.shape_cast %99 : vector<1x8x8xf32> to vector<8x8xf32>
    %101 = vector.extract_strided_slice %87 {offsets = [6, 0, 0], sizes = [1, 8, 8], strides = [1, 1, 1]} : vector<8x8x8xf32> to vector<1x8x8xf32>
    %102 = vector.shape_cast %101 : vector<1x8x8xf32> to vector<8x8xf32>
    %103 = vector.extract_strided_slice %87 {offsets = [7, 0, 0], sizes = [1, 8, 8], strides = [1, 1, 1]} : vector<8x8x8xf32> to vector<1x8x8xf32>
    %104 = vector.shape_cast %103 : vector<1x8x8xf32> to vector<8x8xf32>
    %105 = tpu.concatenate %98, %100, %102, %104 in 1 : vector<8x8xf32>, vector<8x8xf32>, vector<8x8xf32>, vector<8x8xf32> -> vector<8x32xf32>
    %106 = tpu.concatenate %96, %105 in 0 : vector<8x32xf32>, vector<8x32xf32> -> vector<16x32xf32>
    %107 = arith.truncf %106 : vector<16x32xf32> to vector<16x32xbf16>
    %c0_12 = arith.constant 0 : index
    %c0_13 = arith.constant 0 : index
    %c0_14 = arith.constant 0 : index
    %108 = vector.load %arg4[%c0_12, %c0_13, %c0_14] : memref<1x32x32xbf16, #tpu.memory_space<vmem>>, vector<1x32x32xbf16>
    %109 = vector.shape_cast %108 : vector<1x32x32xbf16> to vector<32x32xbf16>
    %cst_15 = arith.constant dense<0.000000e+00> : vector<16x32xf32>
    %110 = tpu.matmul %107, %109, %cst_15 {dimension_numbers = #tpu.dot_dimension_numbers<[1], [0], [0], [1], [0, 0, 1, 1], [], []>} : vector<16x32xbf16>, vector<32x32xbf16>, vector<16x32xf32> -> vector<16x32xf32>
    %111 = vector.broadcast %8 : vector<1x32xf32> to vector<16x32xf32>
    %112 = arith.addf %110, %111 : vector<16x32xf32>
    %113 = arith.addf %3, %112 : vector<16x32xf32>
    %cst_16 = arith.constant dense<0.000000e+00> : vector<16xf32>
    %114 = vector.multi_reduction <add>, %113, %cst_16 [1] : vector<16x32xf32> to vector<16xf32>
    %115 = vector.shape_cast %114 : vector<16xf32> to vector<16x1xf32>
    %cst_17 = arith.constant 3.200000e+01 : f32
    %116 = vector.broadcast %cst_17 : f32 to vector<16x1xf32>
    %117 = arith.divf %115, %116 : vector<16x1xf32>
    %118 = vector.broadcast %117 : vector<16x1xf32> to vector<16x32xf32>
    %119 = arith.subf %113, %118 : vector<16x32xf32>
    %120 = arith.mulf %119, %119 : vector<16x32xf32>
    %cst_18 = arith.constant dense<0.000000e+00> : vector<16xf32>
    %121 = vector.multi_reduction <add>, %120, %cst_18 [1] : vector<16x32xf32> to vector<16xf32>
    %122 = vector.shape_cast %121 : vector<16xf32> to vector<16x1xf32>
    %cst_19 = arith.constant 3.200000e+01 : f32
    %123 = vector.broadcast %cst_19 : f32 to vector<16x1xf32>
    %124 = arith.divf %122, %123 : vector<16x1xf32>
    %cst_20 = arith.constant 9.99999974E-6 : f32
    %125 = vector.broadcast %cst_20 : f32 to vector<16x1xf32>
    %126 = arith.addf %124, %125 : vector<16x1xf32>
    %127 = math.rsqrt %126 : vector<16x1xf32>
    %128 = vector.broadcast %127 : vector<16x1xf32> to vector<16x32xf32>
    %129 = arith.mulf %119, %128 : vector<16x32xf32>
    %130 = vector.broadcast %9 : vector<1x32xf32> to vector<16x32xf32>
    %131 = arith.mulf %129, %130 : vector<16x32xf32>
    %132 = vector.broadcast %10 : vector<1x32xf32> to vector<16x32xf32>
    %133 = arith.addf %131, %132 : vector<16x32xf32>
    %134 = arith.truncf %133 : vector<16x32xf32> to vector<16x32xbf16>
    %c0_21 = arith.constant 0 : index
    %c0_22 = arith.constant 0 : index
    %c0_23 = arith.constant 0 : index
    %135 = vector.load %arg5[%c0_21, %c0_22, %c0_23] : memref<1x32x64xbf16, #tpu.memory_space<vmem>>, vector<1x32x64xbf16>
    %136 = vector.shape_cast %135 : vector<1x32x64xbf16> to vector<32x64xbf16>
    %cst_24 = arith.constant dense<0.000000e+00> : vector<16x64xf32>
    %137 = tpu.matmul %134, %136, %cst_24 {dimension_numbers = #tpu.dot_dimension_numbers<[1], [0], [0], [1], [0, 0, 1, 1], [], []>} : vector<16x32xbf16>, vector<32x64xbf16>, vector<16x64xf32> -> vector<16x64xf32>
    %138 = vector.broadcast %11 : vector<1x64xf32> to vector<16x64xf32>
    %139 = arith.addf %137, %138 : vector<16x64xf32>
    %cst_25 = arith.constant 0.000000e+00 : f32
    %140 = vector.broadcast %cst_25 : f32 to vector<16x64xf32>
    %141 = arith.maximumf %139, %140 : vector<16x64xf32>
    %142 = arith.truncf %141 : vector<16x64xf32> to vector<16x64xbf16>
    %c0_26 = arith.constant 0 : index
    %c0_27 = arith.constant 0 : index
    %c0_28 = arith.constant 0 : index
    %143 = vector.load %arg6[%c0_26, %c0_27, %c0_28] : memref<1x64x32xbf16, #tpu.memory_space<vmem>>, vector<1x64x32xbf16>
    %144 = vector.shape_cast %143 : vector<1x64x32xbf16> to vector<64x32xbf16>
    %cst_29 = arith.constant dense<0.000000e+00> : vector<16x32xf32>
    %145 = tpu.matmul %142, %144, %cst_29 {dimension_numbers = #tpu.dot_dimension_numbers<[1], [0], [0], [1], [0, 0, 1, 1], [], []>} : vector<16x64xbf16>, vector<64x32xbf16>, vector<16x32xf32> -> vector<16x32xf32>
    %146 = vector.broadcast %12 : vector<1x32xf32> to vector<16x32xf32>
    %147 = arith.addf %145, %146 : vector<16x32xf32>
    %148 = arith.addf %133, %147 : vector<16x32xf32>
    %cst_30 = arith.constant dense<0.000000e+00> : vector<16xf32>
    %149 = vector.multi_reduction <add>, %148, %cst_30 [1] : vector<16x32xf32> to vector<16xf32>
    %150 = vector.shape_cast %149 : vector<16xf32> to vector<16x1xf32>
    %cst_31 = arith.constant 3.200000e+01 : f32
    %151 = vector.broadcast %cst_31 : f32 to vector<16x1xf32>
    %152 = arith.divf %150, %151 : vector<16x1xf32>
    %153 = vector.broadcast %152 : vector<16x1xf32> to vector<16x32xf32>
    %154 = arith.subf %148, %153 : vector<16x32xf32>
    %155 = arith.mulf %154, %154 : vector<16x32xf32>
    %cst_32 = arith.constant dense<0.000000e+00> : vector<16xf32>
    %156 = vector.multi_reduction <add>, %155, %cst_32 [1] : vector<16x32xf32> to vector<16xf32>
    %157 = vector.shape_cast %156 : vector<16xf32> to vector<16x1xf32>
    %cst_33 = arith.constant 3.200000e+01 : f32
    %158 = vector.broadcast %cst_33 : f32 to vector<16x1xf32>
    %159 = arith.divf %157, %158 : vector<16x1xf32>
    %cst_34 = arith.constant 9.99999974E-6 : f32
    %160 = vector.broadcast %cst_34 : f32 to vector<16x1xf32>
    %161 = arith.addf %159, %160 : vector<16x1xf32>
    %162 = math.rsqrt %161 : vector<16x1xf32>
    %163 = vector.broadcast %162 : vector<16x1xf32> to vector<16x32xf32>
    %164 = arith.mulf %154, %163 : vector<16x32xf32>
    %165 = vector.broadcast %13 : vector<1x32xf32> to vector<16x32xf32>
    %166 = arith.mulf %164, %165 : vector<16x32xf32>
    %167 = vector.broadcast %14 : vector<1x32xf32> to vector<16x32xf32>
    %168 = arith.addf %166, %167 : vector<16x32xf32>
    %c0_35 = arith.constant 0 : index
    %c0_36 = arith.constant 0 : index
    %169 = vector.load %arg12[%c0_35, %c0_36] : memref<16x32xf32, #tpu.memory_space<vmem>>, vector<16x32xf32>
    tpu.vector_store %arg12[%c0_35, %c0_36], %168 {strides = array<i32>} : memref<16x32xf32, #tpu.memory_space<vmem>>, vector<16x32xf32>,
    %c1_i32 = arith.constant 1 : i32
    %170 = arith.cmpi eq, %arg1, %c1_i32 : i32
    %171 = arith.extui %170 : i1 to i32
    %c0_i32_37 = arith.constant 0 : i32
    %172 = arith.cmpi ne, %171, %c0_i32_37 : i32
    scf.if %172 {
      %c0_38 = arith.constant 0 : index
      %c0_39 = arith.constant 0 : index
      %173 = vector.load %arg8[%c0_38, %c0_39] : memref<2x32xf32, #tpu.memory_space<vmem>>, vector<1x32xf32>
      %c1 = arith.constant 1 : index
      %c0_40 = arith.constant 0 : index
      %174 = vector.load %arg8[%c1, %c0_40] : memref<2x32xf32, #tpu.memory_space<vmem>>, vector<1x32xf32>
      %cst_41 = arith.constant dense<0.000000e+00> : vector<16xf32>
      %175 = vector.multi_reduction <add>, %168, %cst_41 [1] : vector<16x32xf32> to vector<16xf32>
      %176 = vector.shape_cast %175 : vector<16xf32> to vector<16x1xf32>
      %cst_42 = arith.constant 3.200000e+01 : f32
      %177 = vector.broadcast %cst_42 : f32 to vector<16x1xf32>
      %178 = arith.divf %176, %177 : vector<16x1xf32>
      %179 = vector.broadcast %178 : vector<16x1xf32> to vector<16x32xf32>
      %180 = arith.subf %168, %179 : vector<16x32xf32>
      %181 = arith.mulf %180, %180 : vector<16x32xf32>
      %cst_43 = arith.constant dense<0.000000e+00> : vector<16xf32>
      %182 = vector.multi_reduction <add>, %181, %cst_43 [1] : vector<16x32xf32> to vector<16xf32>
      %183 = vector.shape_cast %182 : vector<16xf32> to vector<16x1xf32>
      %cst_44 = arith.constant 3.200000e+01 : f32
      %184 = vector.broadcast %cst_44 : f32 to vector<16x1xf32>
      %185 = arith.divf %183, %184 : vector<16x1xf32>
      %cst_45 = arith.constant 9.99999974E-6 : f32
      %186 = vector.broadcast %cst_45 : f32 to vector<16x1xf32>
      %187 = arith.addf %185, %186 : vector<16x1xf32>
      %188 = math.rsqrt %187 : vector<16x1xf32>
      %189 = vector.broadcast %188 : vector<16x1xf32> to vector<16x32xf32>
      %190 = arith.mulf %180, %189 : vector<16x32xf32>
      %191 = vector.broadcast %173 : vector<1x32xf32> to vector<16x32xf32>
      %192 = arith.mulf %190, %191 : vector<16x32xf32>
      %193 = vector.broadcast %174 : vector<1x32xf32> to vector<16x32xf32>
      %194 = arith.addf %192, %193 : vector<16x32xf32>
      %195 = vector.shape_cast %194 : vector<16x32xf32> to vector<2x8x32xf32>
      %cst_46 = arith.constant dense<0.000000e+00> : vector<2x32xf32>
      %196 = vector.multi_reduction <add>, %195, %cst_46 [1] : vector<2x8x32xf32> to vector<2x32xf32>
      %cst_47 = arith.constant 8.000000e+00 : f32
      %197 = vector.broadcast %cst_47 : f32 to vector<2x32xf32>
      %198 = arith.divf %196, %197 : vector<2x32xf32>
      %199 = arith.truncf %198 : vector<2x32xf32> to vector<2x32xbf16>
      %c0_48 = arith.constant 0 : index
      %c0_49 = arith.constant 0 : index
      %200 = vector.load %arg9[%c0_48, %c0_49] : memref<32x128xbf16, #tpu.memory_space<vmem>>, vector<32x128xbf16>
      %cst_50 = arith.constant dense<0.000000e+00> : vector<2x128xf32>
      %201 = tpu.matmul %199, %200, %cst_50 {dimension_numbers = #tpu.dot_dimension_numbers<[1], [0], [0], [1], [0, 0, 1, 1], [], []>} : vector<2x32xbf16>, vector<32x128xbf16>, vector<2x128xf32> -> vector<2x128xf32>
      %c0_51 = arith.constant 0 : index
      %c0_52 = arith.constant 0 : index
      %202 = vector.load %arg10[%c0_51, %c0_52] : memref<1x128xf32, #tpu.memory_space<vmem>>, vector<1x128xf32>
      %203 = vector.broadcast %202 : vector<1x128xf32> to vector<2x128xf32>
      %204 = arith.addf %201, %203 : vector<2x128xf32>
      %c0_53 = arith.constant 0 : index
      %c0_54 = arith.constant 0 : index
      %c0_55 = arith.constant 0 : index
      %205 = vector.load %arg11[%c0_53, %c0_54, %c0_55] : memref<1x2x128xf32, #tpu.memory_space<vmem>>, vector<1x2x128xf32>
      %206 = vector.shape_cast %205 : vector<1x2x128xf32> to vector<2x128xf32>
      %207 = vector.shape_cast %204 : vector<2x128xf32> to vector<1x2x128xf32>
      tpu.vector_store %arg11[%c0_53, %c0_54, %c0_55], %207 {strides = array<i32>} : memref<1x2x128xf32, #tpu.memory_space<vmem>>, vector<1x2x128xf32>,
    } else {
    }
    return
  }
  func.func @transform_0(%arg0: i32, %arg1: i32) -> (i32, i32, i32) {
    %c0_i32 = arith.constant 0 : i32
    %c0_i32_0 = arith.constant 0 : i32
    %c0_i32_1 = arith.constant 0 : i32
    return %arg0, %c0_i32, %c0_i32_0 : i32, i32, i32
  }
  func.func @transform_1(%arg0: i32, %arg1: i32) -> (i32, i32, i32) {
    %c0_i32 = arith.constant 0 : i32
    %c0_i32_0 = arith.constant 0 : i32
    %c0_i32_1 = arith.constant 0 : i32
    return %arg1, %c0_i32, %c0_i32_0 : i32, i32, i32
  }
  func.func @transform_2(%arg0: i32, %arg1: i32) -> (i32, i32, i32) {
    %c0_i32 = arith.constant 0 : i32
    %c0_i32_0 = arith.constant 0 : i32
    %c0_i32_1 = arith.constant 0 : i32
    return %arg1, %c0_i32, %c0_i32_0 : i32, i32, i32
  }
  func.func @transform_3(%arg0: i32, %arg1: i32) -> (i32, i32, i32) {
    %c0_i32 = arith.constant 0 : i32
    %c0_i32_0 = arith.constant 0 : i32
    %c0_i32_1 = arith.constant 0 : i32
    return %arg1, %c0_i32, %c0_i32_0 : i32, i32, i32
  }
  func.func @transform_4(%arg0: i32, %arg1: i32) -> (i32, i32, i32) {
    %c0_i32 = arith.constant 0 : i32
    %c0_i32_0 = arith.constant 0 : i32
    %c0_i32_1 = arith.constant 0 : i32
    return %arg1, %c0_i32, %c0_i32_0 : i32, i32, i32
  }
  func.func @transform_5(%arg0: i32, %arg1: i32) -> (i32, i32, i32) {
    %c0_i32 = arith.constant 0 : i32
    %c0_i32_0 = arith.constant 0 : i32
    %c0_i32_1 = arith.constant 0 : i32
    return %arg1, %c0_i32, %c0_i32_0 : i32, i32, i32
  }
  func.func @transform_6(%arg0: i32, %arg1: i32) -> (i32, i32) {
    %c0_i32 = arith.constant 0 : i32
    %c0_i32_0 = arith.constant 0 : i32
    %c0_i32_1 = arith.constant 0 : i32
    return %c0_i32, %c0_i32_0 : i32, i32
  }
  func.func @transform_7(%arg0: i32, %arg1: i32) -> (i32, i32) {
    %c0_i32 = arith.constant 0 : i32
    %c0_i32_0 = arith.constant 0 : i32
    %c0_i32_1 = arith.constant 0 : i32
    return %c0_i32, %c0_i32_0 : i32, i32
  }
  func.func @transform_8(%arg0: i32, %arg1: i32) -> (i32, i32) {
    %c0_i32 = arith.constant 0 : i32
    %c0_i32_0 = arith.constant 0 : i32
    %c0_i32_1 = arith.constant 0 : i32
    return %c0_i32, %c0_i32_0 : i32, i32
  }
  func.func @transform_9(%arg0: i32, %arg1: i32) -> (i32, i32, i32) {
    %c0_i32 = arith.constant 0 : i32
    %c0_i32_0 = arith.constant 0 : i32
    %c0_i32_1 = arith.constant 0 : i32
    return %arg0, %c0_i32, %c0_i32_0 : i32, i32, i32
  }
}

</mosaic_0001>

<llo_original>
// kernel: transformer_encoder_forward.1
$region0: #{transformer_encoder_forward.1}
  #allocation0 [shape = 'u32[]', space=smem, size = 0x4, offset = 0x4, fixed_abs, tag = 'smem constant byte address 0x4 - core index']
  #allocation1 [shape = 'u32[72,128]{1,0:T(1,128)}', space=vmem, size = 0x9000, scoped, tag = 'internal scratch']
  #allocation2 [shape = 'f32[16,32]{1,0:T(8,128)}', space=vmem, size = 0x2000, scoped, tag = 'scratch operand']
  %s0 = inlined_call_operand.vmem [shape: f32[2,8,32], index: 0, kind: input, shape index: {}]
  %s1 = inlined_call_operand.vmem [shape: bf16[2,32,96], index: 1, kind: input, shape index: {}]
  %s2 = inlined_call_operand.vmem [shape: bf16[2,32,32], index: 2, kind: input, shape index: {}]
  %s3 = inlined_call_operand.vmem [shape: bf16[2,32,64], index: 3, kind: input, shape index: {}]
  %s4 = inlined_call_operand.vmem [shape: bf16[2,64,32], index: 4, kind: input, shape index: {}]
  %s5 = inlined_call_operand.vmem [shape: f32[2,8,128], index: 5, kind: input, shape index: {}]
  %s6 = inlined_call_operand.vmem [shape: f32[2,32], index: 6, kind: input, shape index: {}]
  %s7 = inlined_call_operand.vmem [shape: bf16[32,128], index: 7, kind: input, shape index: {}]
  %s8 = inlined_call_operand.vmem [shape: f32[1,128], index: 8, kind: input, shape index: {}]
  %s9 = inlined_call_operand.hbm [shape: f32[1,2,128], index: 9, kind: output, shape index: {}]
  %s10 = sld [smem:[#allocation0]]
  $region77: #{transformer_encoder_forward.1} parent=0
    _
  %s12 = ssub.s32 1, %s10
  %s13 = scalar_select 0, %s12, %s10
  $region1: #{transformer_encoder_forward.1} parent=0
    #allocation3 [shape = 'u8[1024]{0}', space=vmem, size = 0x400, scoped, tag = 'output window, operand 0, single buffered']
    #allocation4 [shape = 's32[2]{0}', space=sflag, size = 0x8, scoped, tag = 'scoped memory for transformer_encoder_forward.1']
    %14 = vsyncpa [#allocation4], 0
    loop: start=0, step=1, limit=4
    $region2: #{transformer_encoder_forward.1} parent=1 // loop_pre_header
      _
    $region3: #{transformer_encoder_forward.1} parent=1 // loop_header
      %s16 = sphi 0, %s20
      %p17 = scmp.ge.s32.totalorder %s16, 4
      %s23 = sphi 0, %s35
      %s24 = sphi 0, %s31
      %s25 = sphi 0, %s23
      %s26 = sphi 0, %s24
      %s27 = sphi 0, %s25
      %s28 = sphi 0, %s26
      %s38 = sphi 0, %s40
      %s41 = sphi 0, %s38
      %s42 = sphi 0, %s41
      %s58 = sphi 0, %s42
      %s64 = sphi 0, %s66
      %s67 = sphi 0, %s64
      %s68 = sphi 0, %s67
      %s84 = sphi 0, %s68
      %s90 = sphi 0, %s92
      %s93 = sphi 0, %s90
      %s94 = sphi 0, %s93
      %s110 = sphi 0, %s94
      %s116 = sphi 0, %s118
      %s119 = sphi 0, %s116
      %s120 = sphi 0, %s119
      %s136 = sphi 0, %s120
      %s142 = sphi 0, %s144
      %s145 = sphi 0, %s142
      %s146 = sphi 0, %s145
      %s162 = sphi 0, %s146
      %s168 = sphi 0, %s170
      %s171 = sphi 0, %s168
      %s172 = sphi 0, %s171
      %s188 = sphi 0, %s172
      %s192 = sphi 0, %s192
      %s194 = sphi 0, %s192
      %s195 = sphi 0, %s194
      %s209 = sphi 0, %s195
      %s213 = sphi 0, %s213
      %s215 = sphi 0, %s213
      %s216 = sphi 0, %s215
      %s230 = sphi 0, %s216
      %s234 = sphi 0, %s234
      %s236 = sphi 0, %s234
      %s237 = sphi 0, %s236
      %s251 = sphi 0, %s237
      %s257 = sphi 0, %s259
      %s260 = sphi 0, %s257
      %s261 = sphi 0, %s260
      %s277 = sphi 0, %s261
    $region4: #{transformer_encoder_forward.1} parent=1 // loop_header_branch
      %19 = sbr.rel (%p17) target = $region8
    $region5: #{transformer_encoder_forward.1} parent=1 // loop_body
      %s21 = ssub.s32 %s16, 1
      %s22 = ssub.s32 %s16, 2
      %s29 = sadd.s32 1, %s24
      %p30 = scmp.ge.s32.totalorder %s29, 2
      %s31 = scalar_select %p30, 0, %s29
      %s32 = sadd.s32 1, %s23
      %s33 = scalar_select %p30, %s32, %s23
      %p34 = scmp.ge.s32.totalorder %s33, 1
      %s35 = scalar_select %p34, 0, %s33
      %s36 = ssub.s32 %s23, %s35
      %p37 = scmp.eq.s32.totalorder %s36, 0
      %s39 = sadd.s32 %s38, 1
      %s40 = scalar_select %p37, %s38, %s39
      %p43 = pneg %p37
      %p44 = scmp.eq.s32.totalorder %s16, 1
      %p45 = por %p43, %p44
      %p46 = scmp.ne.s32.totalorder %s38, %s41
      %p47 = scmp.eq.s32.totalorder %s16, 0
      %p48 = por %p46, %p47
      %p49 = scmp.ne.s32.totalorder %s38, %s41
      %p50 = scmp.eq.s32.totalorder %s21, 1
      %p51 = por %p49, %p50
      %p52 = scmp.ne.s32.totalorder %s41, %s42
      %p53 = scmp.eq.s32.totalorder %s21, 0
      %p54 = por %p52, %p53
      %p55 = scmp.ne.s32.totalorder %s41, %s42
      %p56 = scmp.eq.s32.totalorder %s22, 1
      %p57 = por %p55, %p56
      %p59 = scmp.ne.s32.totalorder %s42, %s58
      %p60 = scmp.eq.s32.totalorder %s22, 0
      %p61 = por %p59, %p60
      %s62 = ssub.s32 %s24, %s31
      %p63 = scmp.eq.s32.totalorder %s62, 0
      %s65 = sadd.s32 %s64, 1
      %s66 = scalar_select %p63, %s64, %s65
      %p69 = pneg %p63
      %p70 = scmp.eq.s32.totalorder %s16, 1
      %p71 = por %p69, %p70
      %p72 = scmp.ne.s32.totalorder %s64, %s67
      %p73 = scmp.eq.s32.totalorder %s16, 0
      %p74 = por %p72, %p73
      %p75 = scmp.ne.s32.totalorder %s64, %s67
      %p76 = scmp.eq.s32.totalorder %s21, 1
      %p77 = por %p75, %p76
      %p78 = scmp.ne.s32.totalorder %s67, %s68
      %p79 = scmp.eq.s32.totalorder %s21, 0
      %p80 = por %p78, %p79
      %p81 = scmp.ne.s32.totalorder %s67, %s68
      %p82 = scmp.eq.s32.totalorder %s22, 1
      %p83 = por %p81, %p82
      %p85 = scmp.ne.s32.totalorder %s68, %s84
      %p86 = scmp.eq.s32.totalorder %s22, 0
      %p87 = por %p85, %p86
      %s88 = ssub.s32 %s24, %s31
      %p89 = scmp.eq.s32.totalorder %s88, 0
      %s91 = sadd.s32 %s90, 1
      %s92 = scalar_select %p89, %s90, %s91
      %p95 = pneg %p89
      %p96 = scmp.eq.s32.totalorder %s16, 1
      %p97 = por %p95, %p96
      %p98 = scmp.ne.s32.totalorder %s90, %s93
      %p99 = scmp.eq.s32.totalorder %s16, 0
      %p100 = por %p98, %p99
      %p101 = scmp.ne.s32.totalorder %s90, %s93
      %p102 = scmp.eq.s32.totalorder %s21, 1
      %p103 = por %p101, %p102
      %p104 = scmp.ne.s32.totalorder %s93, %s94
      %p105 = scmp.eq.s32.totalorder %s21, 0
      %p106 = por %p104, %p105
      %p107 = scmp.ne.s32.totalorder %s93, %s94
      %p108 = scmp.eq.s32.totalorder %s22, 1
      %p109 = por %p107, %p108
      %p111 = scmp.ne.s32.totalorder %s94, %s110
      %p112 = scmp.eq.s32.totalorder %s22, 0
      %p113 = por %p111, %p112
      %s114 = ssub.s32 %s24, %s31
      %p115 = scmp.eq.s32.totalorder %s114, 0
      %s117 = sadd.s32 %s116, 1
      %s118 = scalar_select %p115, %s116, %s117
      %p121 = pneg %p115
      %p122 = scmp.eq.s32.totalorder %s16, 1
      %p123 = por %p121, %p122
      %p124 = scmp.ne.s32.totalorder %s116, %s119
      %p125 = scmp.eq.s32.totalorder %s16, 0
      %p126 = por %p124, %p125
      %p127 = scmp.ne.s32.totalorder %s116, %s119
      %p128 = scmp.eq.s32.totalorder %s21, 1
      %p129 = por %p127, %p128
      %p130 = scmp.ne.s32.totalorder %s119, %s120
      %p131 = scmp.eq.s32.totalorder %s21, 0
      %p132 = por %p130, %p131
      %p133 = scmp.ne.s32.totalorder %s119, %s120
      %p134 = scmp.eq.s32.totalorder %s22, 1
      %p135 = por %p133, %p134
      %p137 = scmp.ne.s32.totalorder %s120, %s136
      %p138 = scmp.eq.s32.totalorder %s22, 0
      %p139 = por %p137, %p138
      %s140 = ssub.s32 %s24, %s31
      %p141 = scmp.eq.s32.totalorder %s140, 0
      %s143 = sadd.s32 %s142, 1
      %s144 = scalar_select %p141, %s142, %s143
      %p147 = pneg %p141
      %p148 = scmp.eq.s32.totalorder %s16, 1
      %p149 = por %p147, %p148
      %p150 = scmp.ne.s32.totalorder %s142, %s145
      %p151 = scmp.eq.s32.totalorder %s16, 0
      %p152 = por %p150, %p151
      %p153 = scmp.ne.s32.totalorder %s142, %s145
      %p154 = scmp.eq.s32.totalorder %s21, 1
      %p155 = por %p153, %p154
      %p156 = scmp.ne.s32.totalorder %s145, %s146
      %p157 = scmp.eq.s32.totalorder %s21, 0
      %p158 = por %p156, %p157
      %p159 = scmp.ne.s32.totalorder %s145, %s146
      %p160 = scmp.eq.s32.totalorder %s22, 1
      %p161 = por %p159, %p160
      %p163 = scmp.ne.s32.totalorder %s146, %s162
      %p164 = scmp.eq.s32.totalorder %s22, 0
      %p165 = por %p163, %p164
      %s166 = ssub.s32 %s24, %s31
      %p167 = scmp.eq.s32.totalorder %s166, 0
      %s169 = sadd.s32 %s168, 1
      %s170 = scalar_select %p167, %s168, %s169
      %p173 = pneg %p167
      %p174 = scmp.eq.s32.totalorder %s16, 1
      %p175 = por %p173, %p174
      %p176 = scmp.ne.s32.totalorder %s168, %s171
      %p177 = scmp.eq.s32.totalorder %s16, 0
      %p178 = por %p176, %p177
      %p179 = scmp.ne.s32.totalorder %s168, %s171
      %p180 = scmp.eq.s32.totalorder %s21, 1
      %p181 = por %p179, %p180
      %p182 = scmp.ne.s32.totalorder %s171, %s172
      %p183 = scmp.eq.s32.totalorder %s21, 0
      %p184 = por %p182, %p183
      %p185 = scmp.ne.s32.totalorder %s171, %s172
      %p186 = scmp.eq.s32.totalorder %s22, 1
      %p187 = por %p185, %p186
      %p189 = scmp.ne.s32.totalorder %s172, %s188
      %p190 = scmp.eq.s32.totalorder %s22, 0
      %p191 = por %p189, %p190
      %s193 = sadd.s32 %s192, 1
      %p196 = scmp.eq.s32.totalorder %s16, 1
      %p197 = scmp.ne.s32.totalorder %s192, %s194
      %p198 = scmp.eq.s32.totalorder %s16, 0
      %p199 = por %p197, %p198
      %p200 = scmp.ne.s32.totalorder %s192, %s194
      %p201 = scmp.eq.s32.totalorder %s21, 1
      %p202 = por %p200, %p201
      %p203 = scmp.ne.s32.totalorder %s194, %s195
      %p204 = scmp.eq.s32.totalorder %s21, 0
      %p205 = por %p203, %p204
      %p206 = scmp.ne.s32.totalorder %s194, %s195
      %p207 = scmp.eq.s32.totalorder %s22, 1
      %p208 = por %p206, %p207
      %p210 = scmp.ne.s32.totalorder %s195, %s209
      %p211 = scmp.eq.s32.totalorder %s22, 0
      %p212 = por %p210, %p211
      %s214 = sadd.s32 %s213, 1
      %p217 = scmp.eq.s32.totalorder %s16, 1
      %p218 = scmp.ne.s32.totalorder %s213, %s215
      %p219 = scmp.eq.s32.totalorder %s16, 0
      %p220 = por %p218, %p219
      %p221 = scmp.ne.s32.totalorder %s213, %s215
      %p222 = scmp.eq.s32.totalorder %s21, 1
      %p223 = por %p221, %p222
      %p224 = scmp.ne.s32.totalorder %s215, %s216
      %p225 = scmp.eq.s32.totalorder %s21, 0
      %p226 = por %p224, %p225
      %p227 = scmp.ne.s32.totalorder %s215, %s216
      %p228 = scmp.eq.s32.totalorder %s22, 1
      %p229 = por %p227, %p228
      %p231 = scmp.ne.s32.totalorder %s216, %s230
      %p232 = scmp.eq.s32.totalorder %s22, 0
      %p233 = por %p231, %p232
      %s235 = sadd.s32 %s234, 1
      %p238 = scmp.eq.s32.totalorder %s16, 1
      %p239 = scmp.ne.s32.totalorder %s234, %s236
      %p240 = scmp.eq.s32.totalorder %s16, 0
      %p241 = por %p239, %p240
      %p242 = scmp.ne.s32.totalorder %s234, %s236
      %p243 = scmp.eq.s32.totalorder %s21, 1
      %p244 = por %p242, %p243
      %p245 = scmp.ne.s32.totalorder %s236, %s237
      %p246 = scmp.eq.s32.totalorder %s21, 0
      %p247 = por %p245, %p246
      %p248 = scmp.ne.s32.totalorder %s236, %s237
      %p249 = scmp.eq.s32.totalorder %s22, 1
      %p250 = por %p248, %p249
      %p252 = scmp.ne.s32.totalorder %s237, %s251
      %p253 = scmp.eq.s32.totalorder %s22, 0
      %p254 = por %p252, %p253
      %s255 = ssub.s32 %s23, %s35
      %p256 = scmp.eq.s32.totalorder %s255, 0
      %s258 = sadd.s32 %s257, 1
      %s259 = scalar_select %p256, %s257, %s258
      %p262 = pneg %p256
      %p263 = scmp.eq.s32.totalorder %s16, 1
      %p264 = por %p262, %p263
      %p265 = scmp.ne.s32.totalorder %s257, %s260
      %p266 = scmp.eq.s32.totalorder %s16, 0
      %p267 = por %p265, %p266
      %p268 = scmp.ne.s32.totalorder %s257, %s260
      %p269 = scmp.eq.s32.totalorder %s21, 1
      %p270 = por %p268, %p269
      %p271 = scmp.ne.s32.totalorder %s260, %s261
      %p272 = scmp.eq.s32.totalorder %s21, 0
      %p273 = por %p271, %p272
      %p274 = scmp.ne.s32.totalorder %s260, %s261
      %p275 = scmp.eq.s32.totalorder %s22, 1
      %p276 = por %p274, %p275
      %p278 = scmp.ne.s32.totalorder %s261, %s277
      %p279 = scmp.eq.s32.totalorder %s22, 0
      %p280 = por %p278, %p279
      %p281 = scmp.le.s32.totalorder 1, %s16
      %p282 = scmp.lt.s32.totalorder %s16, 3
      %p283 = pnand %p281, %p282
      %p284 = pneg %p283
      // Predicated region
      $region9: #{transformer_encoder_forward.1} parent=5 // pred_check
        _
      $region10: #{transformer_encoder_forward.1} parent=5 // pred_check_branch
        %286 = sbr.rel (%p283) target = $region12
      $region11: #{transformer_encoder_forward.1} parent=5 // pred_region
        %s287 = ssub.s32 %s16, 1
        // Predicated region
        $region13: #{transformer_encoder_forward.1} parent=11 // pred_check
          %p288 = pneg %p54
        $region14: #{transformer_encoder_forward.1} parent=11 // pred_check_branch
          %290 = sbr.rel (%p288) target = $region16
        $region15: #{transformer_encoder_forward.1} parent=11 // pred_region
          %s291 = smul.u32 2, %s25
          %p292 = scmp.lt.s32.totalorder %s291, 1
          %s293 = scalar_select %p292, %s291, 1
          %s294 = smul.addr %s293, 8
          %s295 = scalar_lea.vmem %s0, %s294
          %s296 = smul.u32 2, %s25
        $region16: #{transformer_encoder_forward.1} parent=11 // pred_fallthru
          _
        // Predicated region
        $region17: #{transformer_encoder_forward.1} parent=11 // pred_check
          %p297 = pneg %p205
        $region18: #{transformer_encoder_forward.1} parent=11 // pred_check_branch
          %299 = sbr.rel (%p297) target = $region20
        $region19: #{transformer_encoder_forward.1} parent=11 // pred_region
          _
        $region20: #{transformer_encoder_forward.1} parent=11 // pred_fallthru
          _
        // Predicated region
        $region21: #{transformer_encoder_forward.1} parent=11 // pred_check
          %p300 = pneg %p226
        $region22: #{transformer_encoder_forward.1} parent=11 // pred_check_branch
          %302 = sbr.rel (%p300) target = $region24
        $region23: #{transformer_encoder_forward.1} parent=11 // pred_region
          _
        $region24: #{transformer_encoder_forward.1} parent=11 // pred_fallthru
          _
        // Predicated region
        $region25: #{transformer_encoder_forward.1} parent=11 // pred_check
          %p303 = pneg %p247
        $region26: #{transformer_encoder_forward.1} parent=11 // pred_check_branch
          %305 = sbr.rel (%p303) target = $region28
        $region27: #{transformer_encoder_forward.1} parent=11 // pred_region
          _
        $region28: #{transformer_encoder_forward.1} parent=11 // pred_fallthru
          _
      $region12: #{transformer_encoder_forward.1} parent=5 // pred_fallthru
        _
      %p306 = scmp.lt.s32.totalorder %s16, 2
      // Predicated region
      $region29: #{transformer_encoder_forward.1} parent=5 // pred_check
        %p307 = pneg %p306
      $region30: #{transformer_encoder_forward.1} parent=5 // pred_check_branch
        %309 = sbr.rel (%p307) target = $region32
      $region31: #{transformer_encoder_forward.1} parent=5 // pred_region
        // Predicated region
        $region33: #{transformer_encoder_forward.1} parent=31 // pred_check
          %p310 = pneg %p74
        $region34: #{transformer_encoder_forward.1} parent=31 // pred_check_branch
          %312 = sbr.rel (%p310) target = $region36
        $region35: #{transformer_encoder_forward.1} parent=31 // pred_region
          %p313 = scmp.lt.s32.totalorder %s24, 1
          %s314 = scalar_select %p313, %s24, 1
          %s315 = smul.addr %s314, 4
          %s316 = smul.addr %s315, 4
          %s317 = scalar_lea.vmem %s1, %s316
        $region36: #{transformer_encoder_forward.1} parent=31 // pred_fallthru
          _
        // Predicated region
        $region37: #{transformer_encoder_forward.1} parent=31 // pred_check
          %p318 = pneg %p100
        $region38: #{transformer_encoder_forward.1} parent=31 // pred_check_branch
          %320 = sbr.rel (%p318) target = $region40
        $region39: #{transformer_encoder_forward.1} parent=31 // pred_region
          %p321 = scmp.lt.s32.totalorder %s24, 1
          %s322 = scalar_select %p321, %s24, 1
          %s323 = smul.addr %s322, 4
          %s324 = smul.addr %s323, 4
          %s325 = scalar_lea.vmem %s2, %s324
        $region40: #{transformer_encoder_forward.1} parent=31 // pred_fallthru
          _
        // Predicated region
        $region41: #{transformer_encoder_forward.1} parent=31 // pred_check
          %p326 = pneg %p126
        $region42: #{transformer_encoder_forward.1} parent=31 // pred_check_branch
          %328 = sbr.rel (%p326) target = $region44
        $region43: #{transformer_encoder_forward.1} parent=31 // pred_region
          %p329 = scmp.lt.s32.totalorder %s24, 1
          %s330 = scalar_select %p329, %s24, 1
          %s331 = smul.addr %s330, 4
          %s332 = smul.addr %s331, 4
          %s333 = scalar_lea.vmem %s3, %s332
        $region44: #{transformer_encoder_forward.1} parent=31 // pred_fallthru
          _
        // Predicated region
        $region45: #{transformer_encoder_forward.1} parent=31 // pred_check
          %p334 = pneg %p152
        $region46: #{transformer_encoder_forward.1} parent=31 // pred_check_branch
          %336 = sbr.rel (%p334) target = $region48
        $region47: #{transformer_encoder_forward.1} parent=31 // pred_region
          %p337 = scmp.lt.s32.totalorder %s24, 1
          %s338 = scalar_select %p337, %s24, 1
          %s339 = smul.addr %s338, 8
          %s340 = smul.addr %s339, 4
          %s341 = scalar_lea.vmem %s4, %s340
        $region48: #{transformer_encoder_forward.1} parent=31 // pred_fallthru
          _
        // Predicated region
        $region49: #{transformer_encoder_forward.1} parent=31 // pred_check
          %p342 = pneg %p178
        $region50: #{transformer_encoder_forward.1} parent=31 // pred_check_branch
          %344 = sbr.rel (%p342) target = $region52
        $region51: #{transformer_encoder_forward.1} parent=31 // pred_region
          %p345 = scmp.lt.s32.totalorder %s24, 1
          %s346 = scalar_select %p345, %s24, 1
          %s347 = smul.addr %s346, 8
          %s348 = scalar_lea.vmem %s5, %s347
        $region52: #{transformer_encoder_forward.1} parent=31 // pred_fallthru
          _
      $region32: #{transformer_encoder_forward.1} parent=5 // pred_fallthru
        _
      %p349 = scmp.le.s32.totalorder 1, %s16
      %p350 = scmp.lt.s32.totalorder %s16, 3
      %p351 = pnand %p349, %p350
      %p352 = pneg %p351
      // Predicated region
      $region53: #{transformer_encoder_forward.1} parent=5 // pred_check
        _
      $region54: #{transformer_encoder_forward.1} parent=5 // pred_check_branch
        %354 = sbr.rel (%p351) target = $region56
      $region55: #{transformer_encoder_forward.1} parent=5 // pred_region
        %s355 = ssub.s32 %s16, 1
        %s356 = smul.u32 2, %s25
        %p357 = scmp.lt.s32.totalorder %s356, 1
        %s358 = scalar_select %p357, %s356, 1
        %s359 = smul.addr %s358, 8
        %s360 = scalar_lea.vmem %s0, %s359
        %p361 = pneg %p54
        %p362 = pneg %p51
        %p363 = scmp.lt.s32.totalorder %s26, 1
        %s364 = scalar_select %p363, %s26, 1
        %s365 = smul.addr %s364, 4
        %s366 = smul.addr %s365, 4
        %s367 = scalar_lea.vmem %s1, %s366
        %p368 = pneg %p80
        %p369 = pneg %p77
        %p370 = scmp.lt.s32.totalorder %s26, 1
        %s371 = scalar_select %p370, %s26, 1
        %s372 = smul.addr %s371, 4
        %s373 = smul.addr %s372, 4
        %s374 = scalar_lea.vmem %s2, %s373
        %p375 = pneg %p106
        %p376 = pneg %p103
        %p377 = scmp.lt.s32.totalorder %s26, 1
        %s378 = scalar_select %p377, %s26, 1
        %s379 = smul.addr %s378, 4
        %s380 = smul.addr %s379, 4
        %s381 = scalar_lea.vmem %s3, %s380
        %p382 = pneg %p132
        %p383 = pneg %p129
        %p384 = scmp.lt.s32.totalorder %s26, 1
        %s385 = scalar_select %p384, %s26, 1
        %s386 = smul.addr %s385, 8
        %s387 = smul.addr %s386, 4
        %s388 = scalar_lea.vmem %s4, %s387
        %p389 = pneg %p158
        %p390 = pneg %p155
        %p391 = scmp.lt.s32.totalorder %s26, 1
        %s392 = scalar_select %p391, %s26, 1
        %s393 = smul.addr %s392, 8
        %s394 = scalar_lea.vmem %s5, %s393
        %p395 = pneg %p184
        %p396 = pneg %p181
        %p397 = pneg %p205
        %p398 = pneg %p202
        %p399 = pneg %p226
        %p400 = pneg %p223
        %p401 = pneg %p247
        %p402 = pneg %p244
        %p403 = pneg %p273
        %p404 = pneg %p270
        %s405 = smul.u32 2, %s25
        %p406 = scmp.lt.s32.totalorder %s405, 1
        %s407 = scalar_select %p406, %s405, 1
        %s408 = smul.addr %s407, 8
        %s409 = scalar_lea.vmem %s0, %s408
        %s410 = smul.u32 2, %s25
        %p411 = scmp.lt.s32.totalorder %s26, 1
        %s412 = scalar_select %p411, %s26, 1
        %s413 = smul.addr %s412, 4
        %s414 = smul.addr %s413, 4
        %s415 = scalar_lea.vmem %s1, %s414
        %p416 = scmp.lt.s32.totalorder %s26, 1
        %s417 = scalar_select %p416, %s26, 1
        %s418 = smul.addr %s417, 4
        %s419 = smul.addr %s418, 4
        %s420 = scalar_lea.vmem %s2, %s419
        %p421 = scmp.lt.s32.totalorder %s26, 1
        %s422 = scalar_select %p421, %s26, 1
        %s423 = smul.addr %s422, 4
        %s424 = smul.addr %s423, 4
        %s425 = scalar_lea.vmem %s3, %s424
        %p426 = scmp.lt.s32.totalorder %s26, 1
        %s427 = scalar_select %p426, %s26, 1
        %s428 = smul.addr %s427, 8
        %s429 = smul.addr %s428, 4
        %s430 = scalar_lea.vmem %s4, %s429
        %p431 = scmp.lt.s32.totalorder %s26, 1
        %s432 = scalar_select %p431, %s26, 1
        %s433 = smul.addr %s432, 8
        %s434 = scalar_lea.vmem %s5, %s433
        %p436 = scmp.eq.s32.totalorder %s26, 0
        // Predicated region
        $region57: #{transformer_encoder_forward.1} parent=55 // pred_check
          %p437 = pneg %p436
        $region58: #{transformer_encoder_forward.1} parent=55 // pred_check_branch
          %439 = sbr.rel (%p437) target = $region60
        $region59: #{transformer_encoder_forward.1} parent=55 // pred_region
          %v440 = vld [vmem:[%s409] sm:$0xff]
          %v441 = vld [vmem:[%s409 + $0x8] sm:$0xff]
          %vm442 = vcmask 261120
          %443 = vst.msk [vmem:[#allocation2] sm:$0xff] %vm442, %v440
          %444 = vst.msk [vmem:[#allocation2 + $0x8] sm:$0xff] %vm442, %v441
        $region60: #{transformer_encoder_forward.1} parent=55 // pred_fallthru
          _
        %v445 = vld [vmem:[#allocation2] sm:$0xff]
        %v446 = vld [vmem:[#allocation2 + $0x8] sm:$0xff]
        %v447 = vpack.c.bf16 %v446, %v445
        %v448 = vld [vmem:[%s434] sm:$0xff]
        %v449 = vld [vmem:[%s415] sm:$0xf]
        %v450 = vld [vmem:[%s415 + $0x4] sm:$0xf]
        %v451 = vld [vmem:[%s415 + $0x8] sm:$0xf]
        %v452 = vld [vmem:[%s415 + $0xc] sm:$0xf]
        %v453 = vperm.slane %v448, 0
        %v458 = vunpack.c.l.b16 %v449
        %v459 = vunpack.c.l.b16 %v450
        %v460 = vunpack.c.l.b16 %v451
        %v461 = vunpack.c.l.b16 %v452
        %v462 = vpack.c.b16 %v459, %v458
        %v463 = vpack.c.b16 %v461, %v460
        %vm466 = vcmask 261120
        %v468 = vsel %vm466, %v447, 0
        %470 = vmatpush.bf16.msra.mxu0 0
        %471 = vmatpush.bf16.msra.mxu0 0
        %472 = vmatpush.bf16.msra.mxu0 0
        %473 = vmatpush.bf16.msra.mxu0 0
        %474 = vmatpush.bf16.msra.mxu0 0
        %475 = vmatpush.bf16.msra.mxu0 0
        %476 = vmatpush.bf16.msra.mxu0 %v463
        %477 = vmatpush.bf16.msra.mxu0 %v462
        %478 = vmatmul.bf16.gmra.mxu0 %v468
        %v479 = vpop.f32.mrf.mxu0
        %v480 = vadd.f32 %v453, %v479
        %v481 = vpop.f32.mrf.mxu0
        %v482 = vadd.f32 %v453, %v481
        %483 = vdwg.mxu0
        %v484 = vpack.c.bf16 %v480, %v480
        %v485 = vpack.c.bf16 %v482, %v482
        %487 = vrot.lane.b32.xlu0 %v484, 120
        %v488 = vpop.permute.xlu0 %487
        %489 = vrot.lane.b32.xlu0 %v484, 112
        %v490 = vpop.permute.xlu0 %489
        %491 = vrot.lane.b32.xlu0 %v484, 104
        %v492 = vpop.permute.xlu0 %491
        %494 = vrot.lane.b32.xlu0 %v485, 120
        %v495 = vpop.permute.xlu0 %494
        %496 = vrot.lane.b32.xlu0 %v485, 112
        %v497 = vpop.permute.xlu0 %496
        %498 = vrot.lane.b32.xlu0 %v485, 104
        %v499 = vpop.permute.xlu0 %498
        %v500 = vunpack.c.l.b16 %v484
        %v501 = vpack.c.b16 %v500, %v500
        %502 = vrot.lane.b32.xlu0 %v501, 96
        %v503 = vpop.permute.xlu0 %502
        %vm504 = vcmask 64512
        %v506 = vsel %vm504, %v484, 0
        %v509 = vsel %vm504, %v503, 0
        %511 = vmatpush.bf16.xpose.msra.mxu0 0
        %512 = vmatpush.bf16.xpose.msra.mxu0 0
        %513 = vmatpush.bf16.xpose.msra.mxu0 0
        %514 = vmatpush.bf16.xpose.msra.mxu0 0
        %515 = vmatpush.bf16.xpose.msra.mxu0 0
        %516 = vmatpush.bf16.xpose.msra.mxu0 0
        %517 = vmatpush.bf16.xpose.msra.mxu0 0
        %518 = vmatpush.bf16.xpose.msra.mxu0 %v509
        %519 = vmatmul.bf16.gmra.mxu0 %v506
        %v520 = vpop.f32.mrf.mxu0
        %v521 = vadd.f32 0.0, %v520
        %v522 = vpop.f32.mrf.mxu0
        %523 = vdwg.mxu0
        %v524 = vunpack.c.l.b16 %v488
        %v525 = vpack.c.b16 %v524, %v524
        %526 = vrot.lane.b32.xlu0 %v525, 96
        %v527 = vpop.permute.xlu0 %526
        %v529 = vsel %vm504, %v488, 0
        %v532 = vsel %vm504, %v527, 0
        %534 = vmatpush.bf16.xpose.msra.mxu0 0
        %535 = vmatpush.bf16.xpose.msra.mxu0 0
        %536 = vmatpush.bf16.xpose.msra.mxu0 0
        %537 = vmatpush.bf16.xpose.msra.mxu0 0
        %538 = vmatpush.bf16.xpose.msra.mxu0 0
        %539 = vmatpush.bf16.xpose.msra.mxu0 0
        %540 = vmatpush.bf16.xpose.msra.mxu0 0
        %541 = vmatpush.bf16.xpose.msra.mxu0 %v532
        %542 = vmatmul.bf16.gmra.mxu0 %v529
        %v543 = vpop.f32.mrf.mxu0
        %v544 = vadd.f32 0.0, %v543
        %v545 = vpop.f32.mrf.mxu0
        %546 = vdwg.mxu0
        %v547 = vunpack.c.l.b16 %v490
        %v548 = vpack.c.b16 %v547, %v547
        %549 = vrot.lane.b32.xlu0 %v548, 96
        %v550 = vpop.permute.xlu0 %549
        %v552 = vsel %vm504, %v490, 0
        %v555 = vsel %vm504, %v550, 0
        %557 = vmatpush.bf16.xpose.msra.mxu0 0
        %558 = vmatpush.bf16.xpose.msra.mxu0 0
        %559 = vmatpush.bf16.xpose.msra.mxu0 0
        %560 = vmatpush.bf16.xpose.msra.mxu0 0
        %561 = vmatpush.bf16.xpose.msra.mxu0 0
        %562 = vmatpush.bf16.xpose.msra.mxu0 0
        %563 = vmatpush.bf16.xpose.msra.mxu0 0
        %564 = vmatpush.bf16.xpose.msra.mxu0 %v555
        %565 = vmatmul.bf16.gmra.mxu0 %v552
        %v566 = vpop.f32.mrf.mxu0
        %v567 = vadd.f32 0.0, %v566
        %v568 = vpop.f32.mrf.mxu0
        %569 = vdwg.mxu0
        %v570 = vunpack.c.l.b16 %v492
        %v571 = vpack.c.b16 %v570, %v570
        %572 = vrot.lane.b32.xlu0 %v571, 96
        %v573 = vpop.permute.xlu0 %572
        %v575 = vsel %vm504, %v492, 0
        %v578 = vsel %vm504, %v573, 0
        %580 = vmatpush.bf16.xpose.msra.mxu0 0
        %581 = vmatpush.bf16.xpose.msra.mxu0 0
        %582 = vmatpush.bf16.xpose.msra.mxu0 0
        %583 = vmatpush.bf16.xpose.msra.mxu0 0
        %584 = vmatpush.bf16.xpose.msra.mxu0 0
        %585 = vmatpush.bf16.xpose.msra.mxu0 0
        %586 = vmatpush.bf16.xpose.msra.mxu0 0
        %587 = vmatpush.bf16.xpose.msra.mxu0 %v578
        %588 = vmatmul.bf16.gmra.mxu0 %v575
        %v589 = vpop.f32.mrf.mxu0
        %v590 = vadd.f32 0.0, %v589
        %v591 = vpop.f32.mrf.mxu0
        %592 = vdwg.mxu0
        %v593 = vunpack.c.l.b16 %v485
        %v594 = vpack.c.b16 %v593, %v593
        %595 = vrot.lane.b32.xlu0 %v594, 96
        %v596 = vpop.permute.xlu0 %595
        %v598 = vsel %vm504, %v485, 0
        %v601 = vsel %vm504, %v596, 0
        %603 = vmatpush.bf16.xpose.msra.mxu0 0
        %604 = vmatpush.bf16.xpose.msra.mxu0 0
        %605 = vmatpush.bf16.xpose.msra.mxu0 0
        %606 = vmatpush.bf16.xpose.msra.mxu0 0
        %607 = vmatpush.bf16.xpose.msra.mxu0 0
        %608 = vmatpush.bf16.xpose.msra.mxu0 0
        %609 = vmatpush.bf16.xpose.msra.mxu0 0
        %610 = vmatpush.bf16.xpose.msra.mxu0 %v601
        %611 = vmatmul.bf16.gmra.mxu0 %v598
        %v612 = vpop.f32.mrf.mxu0
        %v613 = vadd.f32 0.0, %v612
        %v614 = vpop.f32.mrf.mxu0
        %615 = vdwg.mxu0
        %v616 = vunpack.c.l.b16 %v495
        %v617 = vpack.c.b16 %v616, %v616
        %618 = vrot.lane.b32.xlu0 %v617, 96
        %v619 = vpop.permute.xlu0 %618
        %v621 = vsel %vm504, %v495, 0
        %v624 = vsel %vm504, %v619, 0
        %626 = vmatpush.bf16.xpose.msra.mxu0 0
        %627 = vmatpush.bf16.xpose.msra.mxu0 0
        %628 = vmatpush.bf16.xpose.msra.mxu0 0
        %629 = vmatpush.bf16.xpose.msra.mxu0 0
        %630 = vmatpush.bf16.xpose.msra.mxu0 0
        %631 = vmatpush.bf16.xpose.msra.mxu0 0
        %632 = vmatpush.bf16.xpose.msra.mxu0 0
        %633 = vmatpush.bf16.xpose.msra.mxu0 %v624
        %634 = vmatmul.bf16.gmra.mxu0 %v621
        %v635 = vpop.f32.mrf.mxu0
        %v636 = vadd.f32 0.0, %v635
        %v637 = vpop.f32.mrf.mxu0
        %638 = vdwg.mxu0
        %v639 = vunpack.c.l.b16 %v497
        %v640 = vpack.c.b16 %v639, %v639
        %641 = vrot.lane.b32.xlu0 %v640, 96
        %v642 = vpop.permute.xlu0 %641
        %v644 = vsel %vm504, %v497, 0
        %v647 = vsel %vm504, %v642, 0
        %649 = vmatpush.bf16.xpose.msra.mxu0 0
        %650 = vmatpush.bf16.xpose.msra.mxu0 0
        %651 = vmatpush.bf16.xpose.msra.mxu0 0
        %652 = vmatpush.bf16.xpose.msra.mxu0 0
        %653 = vmatpush.bf16.xpose.msra.mxu0 0
        %654 = vmatpush.bf16.xpose.msra.mxu0 0
        %655 = vmatpush.bf16.xpose.msra.mxu0 0
        %656 = vmatpush.bf16.xpose.msra.mxu0 %v647
        %657 = vmatmul.bf16.gmra.mxu0 %v644
        %v658 = vpop.f32.mrf.mxu0
        %v659 = vadd.f32 0.0, %v658
        %v660 = vpop.f32.mrf.mxu0
        %661 = vdwg.mxu0
        %v662 = vunpack.c.l.b16 %v499
        %v663 = vpack.c.b16 %v662, %v662
        %664 = vrot.lane.b32.xlu0 %v663, 96
        %v665 = vpop.permute.xlu0 %664
        %v667 = vsel %vm504, %v499, 0
        %v670 = vsel %vm504, %v665, 0
        %672 = vmatpush.bf16.xpose.msra.mxu0 0
        %673 = vmatpush.bf16.xpose.msra.mxu0 0
        %674 = vmatpush.bf16.xpose.msra.mxu0 0
        %675 = vmatpush.bf16.xpose.msra.mxu0 0
        %676 = vmatpush.bf16.xpose.msra.mxu0 0
        %677 = vmatpush.bf16.xpose.msra.mxu0 0
        %678 = vmatpush.bf16.xpose.msra.mxu0 0
        %679 = vmatpush.bf16.xpose.msra.mxu0 %v670
        %680 = vmatmul.bf16.gmra.mxu0 %v667
        %v681 = vpop.f32.mrf.mxu0
        %v682 = vadd.f32 0.0, %v681
        %v683 = vpop.f32.mrf.mxu0
        %684 = vdwg.mxu0
        %v685 = vsel %vm504, %v521, -inf
        %686 = vmax.xlane.f32.xlu0 %v685
        %v687 = vpop.xlane.xlu0 %686
        %v688 = vsel %vm504, %v544, -inf
        %689 = vmax.xlane.f32.xlu0 %v688
        %v690 = vpop.xlane.xlu0 %689
        %v691 = vsel %vm504, %v567, -inf
        %692 = vmax.xlane.f32.xlu0 %v691
        %v693 = vpop.xlane.xlu0 %692
        %v694 = vsel %vm504, %v590, -inf
        %695 = vmax.xlane.f32.xlu0 %v694
        %v696 = vpop.xlane.xlu0 %695
        %v697 = vsel %vm504, %v613, -inf
        %698 = vmax.xlane.f32.xlu0 %v697
        %v699 = vpop.xlane.xlu0 %698
        %v700 = vsel %vm504, %v636, -inf
        %701 = vmax.xlane.f32.xlu0 %v700
        %v702 = vpop.xlane.xlu0 %701
        %v703 = vsel %vm504, %v659, -inf
        %704 = vmax.xlane.f32.xlu0 %v703
        %v705 = vpop.xlane.xlu0 %704
        %v706 = vsel %vm504, %v682, -inf
        %707 = vmax.xlane.f32.xlu0 %v706
        %v708 = vpop.xlane.xlu0 %707
        %v709 = vsub.f32 %v521, %v687
        %v710 = vsub.f32 %v544, %v690
        %v711 = vsub.f32 %v567, %v693
        %v712 = vsub.f32 %v590, %v696
        %v713 = vsub.f32 %v613, %v699
        %v714 = vsub.f32 %v636, %v702
        %v715 = vsub.f32 %v659, %v705
        %v716 = vsub.f32 %v682, %v708
        %v717 = vmul.f32 %v709, 1.442695
        %v718 = vpow.pop %v717
        %v719 = vmul.f32 %v710, 1.442695
        %v720 = vpow.pop %v719
        %v721 = vmul.f32 %v711, 1.442695
        %v722 = vpow.pop %v721
        %v723 = vmul.f32 %v712, 1.442695
        %v724 = vpow.pop %v723
        %v725 = vmul.f32 %v713, 1.442695
        %v726 = vpow.pop %v725
        %v727 = vmul.f32 %v714, 1.442695
        %v728 = vpow.pop %v727
        %v729 = vmul.f32 %v715, 1.442695
        %v730 = vpow.pop %v729
        %v731 = vmul.f32 %v716, 1.442695
        %v732 = vpow.pop %v731
        %v733 = vsel %vm504, %v718, 0.0
        %734 = vadd.xlane.f32.xlu0 %v733
        %v735 = vpop.xlane.xlu0 %734
        %v736 = vsel %vm504, %v720, 0.0
        %737 = vadd.xlane.f32.xlu0 %v736
        %v738 = vpop.xlane.xlu0 %737
        %v739 = vsel %vm504, %v722, 0.0
        %740 = vadd.xlane.f32.xlu0 %v739
        %v741 = vpop.xlane.xlu0 %740
        %v742 = vsel %vm504, %v724, 0.0
        %743 = vadd.xlane.f32.xlu0 %v742
        %v744 = vpop.xlane.xlu0 %743
        %v745 = vsel %vm504, %v726, 0.0
        %746 = vadd.xlane.f32.xlu0 %v745
        %v747 = vpop.xlane.xlu0 %746
        %v748 = vsel %vm504, %v728, 0.0
        %749 = vadd.xlane.f32.xlu0 %v748
        %v750 = vpop.xlane.xlu0 %749
        %v751 = vsel %vm504, %v730, 0.0
        %752 = vadd.xlane.f32.xlu0 %v751
        %v753 = vpop.xlane.xlu0 %752
        %v754 = vsel %vm504, %v732, 0.0
        %755 = vadd.xlane.f32.xlu0 %v754
        %v756 = vpop.xlane.xlu0 %755
        %v757 = vrcp.pop %v735
        %v758 = vrcp.pop %v738
        %v759 = vrcp.pop %v741
        %v760 = vrcp.pop %v744
        %v761 = vrcp.pop %v747
        %v762 = vrcp.pop %v750
        %v763 = vrcp.pop %v753
        %v764 = vrcp.pop %v756
        %v765 = vmul.f32 %v718, %v757
        %v766 = vmul.f32 %v720, %v758
        %v767 = vmul.f32 %v722, %v759
        %v768 = vmul.f32 %v724, %v760
        %v769 = vmul.f32 %v726, %v761
        %v770 = vmul.f32 %v728, %v762
        %v771 = vmul.f32 %v730, %v763
        %v772 = vmul.f32 %v732, %v764
        %v773 = vpack.c.bf16 %v765, %v765
        %v774 = vpack.c.bf16 %v766, %v766
        %v775 = vpack.c.bf16 %v767, %v767
        %v776 = vpack.c.bf16 %v768, %v768
        %v777 = vpack.c.bf16 %v769, %v769
        %v778 = vpack.c.bf16 %v770, %v770
        %v779 = vpack.c.bf16 %v771, %v771
        %v780 = vpack.c.bf16 %v772, %v772
        %781 = vrot.lane.b32.xlu0 %v501, 64
        %v782 = vpop.permute.xlu0 %781
        %v784 = vsel %vm504, %v773, 0
        %vm786 = vcmask 1043456
        %v788 = vsel %vm786, %v782, 0
        %790 = vmatpush.bf16.msra.mxu0 0
        %791 = vmatpush.bf16.msra.mxu0 0
        %792 = vmatpush.bf16.msra.mxu0 0
        %793 = vmatpush.bf16.msra.mxu0 0
        %794 = vmatpush.bf16.msra.mxu0 0
        %795 = vmatpush.bf16.msra.mxu0 0
        %796 = vmatpush.bf16.msra.mxu0 0
        %797 = vmatpush.bf16.msra.mxu0 %v788
        %798 = vmatmul.bf16.gmra.mxu0 %v784
        %v799 = vpop.f32.mrf.mxu0
        %v800 = vadd.f32 0.0, %v799
        %v801 = vpop.f32.mrf.mxu0
        %802 = vdwg.mxu0
        %803 = vrot.lane.b32.xlu0 %v525, 64
        %v804 = vpop.permute.xlu0 %803
        %v806 = vsel %vm504, %v774, 0
        %v809 = vsel %vm786, %v804, 0
        %811 = vmatpush.bf16.msra.mxu0 0
        %812 = vmatpush.bf16.msra.mxu0 0
        %813 = vmatpush.bf16.msra.mxu0 0
        %814 = vmatpush.bf16.msra.mxu0 0
        %815 = vmatpush.bf16.msra.mxu0 0
        %816 = vmatpush.bf16.msra.mxu0 0
        %817 = vmatpush.bf16.msra.mxu0 0
        %818 = vmatpush.bf16.msra.mxu0 %v809
        %819 = vmatmul.bf16.gmra.mxu0 %v806
        %v820 = vpop.f32.mrf.mxu0
        %v821 = vadd.f32 0.0, %v820
        %v822 = vpop.f32.mrf.mxu0
        %823 = vdwg.mxu0
        %824 = vrot.lane.b32.xlu0 %v548, 64
        %v825 = vpop.permute.xlu0 %824
        %v827 = vsel %vm504, %v775, 0
        %v830 = vsel %vm786, %v825, 0
        %832 = vmatpush.bf16.msra.mxu0 0
        %833 = vmatpush.bf16.msra.mxu0 0
        %834 = vmatpush.bf16.msra.mxu0 0
        %835 = vmatpush.bf16.msra.mxu0 0
        %836 = vmatpush.bf16.msra.mxu0 0
        %837 = vmatpush.bf16.msra.mxu0 0
        %838 = vmatpush.bf16.msra.mxu0 0
        %839 = vmatpush.bf16.msra.mxu0 %v830
        %840 = vmatmul.bf16.gmra.mxu0 %v827
        %v841 = vpop.f32.mrf.mxu0
        %v842 = vadd.f32 0.0, %v841
        %v843 = vpop.f32.mrf.mxu0
        %844 = vdwg.mxu0
        %845 = vrot.lane.b32.xlu0 %v571, 64
        %v846 = vpop.permute.xlu0 %845
        %v848 = vsel %vm504, %v776, 0
        %v851 = vsel %vm786, %v846, 0
        %853 = vmatpush.bf16.msra.mxu0 0
        %854 = vmatpush.bf16.msra.mxu0 0
        %855 = vmatpush.bf16.msra.mxu0 0
        %856 = vmatpush.bf16.msra.mxu0 0
        %857 = vmatpush.bf16.msra.mxu0 0
        %858 = vmatpush.bf16.msra.mxu0 0
        %859 = vmatpush.bf16.msra.mxu0 0
        %860 = vmatpush.bf16.msra.mxu0 %v851
        %861 = vmatmul.bf16.gmra.mxu0 %v848
        %v862 = vpop.f32.mrf.mxu0
        %v863 = vadd.f32 0.0, %v862
        %v864 = vpop.f32.mrf.mxu0
        %865 = vdwg.mxu0
        %866 = vrot.lane.b32.xlu0 %v594, 64
        %v867 = vpop.permute.xlu0 %866
        %v869 = vsel %vm504, %v777, 0
        %v872 = vsel %vm786, %v867, 0
        %874 = vmatpush.bf16.msra.mxu0 0
        %875 = vmatpush.bf16.msra.mxu0 0
        %876 = vmatpush.bf16.msra.mxu0 0
        %877 = vmatpush.bf16.msra.mxu0 0
        %878 = vmatpush.bf16.msra.mxu0 0
        %879 = vmatpush.bf16.msra.mxu0 0
        %880 = vmatpush.bf16.msra.mxu0 0
        %881 = vmatpush.bf16.msra.mxu0 %v872
        %882 = vmatmul.bf16.gmra.mxu0 %v869
        %v883 = vpop.f32.mrf.mxu0
        %v884 = vadd.f32 0.0, %v883
        %v885 = vpop.f32.mrf.mxu0
        %886 = vdwg.mxu0
        %887 = vrot.lane.b32.xlu0 %v617, 64
        %v888 = vpop.permute.xlu0 %887
        %v890 = vsel %vm504, %v778, 0
        %v893 = vsel %vm786, %v888, 0
        %895 = vmatpush.bf16.msra.mxu0 0
        %896 = vmatpush.bf16.msra.mxu0 0
        %897 = vmatpush.bf16.msra.mxu0 0
        %898 = vmatpush.bf16.msra.mxu0 0
        %899 = vmatpush.bf16.msra.mxu0 0
        %900 = vmatpush.bf16.msra.mxu0 0
        %901 = vmatpush.bf16.msra.mxu0 0
        %902 = vmatpush.bf16.msra.mxu0 %v893
        %903 = vmatmul.bf16.gmra.mxu0 %v890
        %v904 = vpop.f32.mrf.mxu0
        %v905 = vadd.f32 0.0, %v904
        %v906 = vpop.f32.mrf.mxu0
        %907 = vdwg.mxu0
        %908 = vrot.lane.b32.xlu0 %v640, 64
        %v909 = vpop.permute.xlu0 %908
        %v911 = vsel %vm504, %v779, 0
        %v914 = vsel %vm786, %v909, 0
        %916 = vmatpush.bf16.msra.mxu0 0
        %917 = vmatpush.bf16.msra.mxu0 0
        %918 = vmatpush.bf16.msra.mxu0 0
        %919 = vmatpush.bf16.msra.mxu0 0
        %920 = vmatpush.bf16.msra.mxu0 0
        %921 = vmatpush.bf16.msra.mxu0 0
        %922 = vmatpush.bf16.msra.mxu0 0
        %923 = vmatpush.bf16.msra.mxu0 %v914
        %924 = vmatmul.bf16.gmra.mxu0 %v911
        %v925 = vpop.f32.mrf.mxu0
        %v926 = vadd.f32 0.0, %v925
        %v927 = vpop.f32.mrf.mxu0
        %928 = vdwg.mxu0
        %929 = vrot.lane.b32.xlu0 %v663, 64
        %v930 = vpop.permute.xlu0 %929
        %v932 = vsel %vm504, %v780, 0
        %v935 = vsel %vm786, %v930, 0
        %937 = vmatpush.bf16.msra.mxu0 0
        %938 = vmatpush.bf16.msra.mxu0 0
        %939 = vmatpush.bf16.msra.mxu0 0
        %940 = vmatpush.bf16.msra.mxu0 0
        %941 = vmatpush.bf16.msra.mxu0 0
        %942 = vmatpush.bf16.msra.mxu0 0
        %943 = vmatpush.bf16.msra.mxu0 0
        %944 = vmatpush.bf16.msra.mxu0 %v935
        %945 = vmatmul.bf16.gmra.mxu0 %v932
        %v946 = vpop.f32.mrf.mxu0
        %v947 = vadd.f32 0.0, %v946
        %v948 = vpop.f32.mrf.mxu0
        %949 = vdwg.mxu0
        %951 = vrot.lane.b32.xlu0 %v821, 8
        %v952 = vpop.permute.xlu0 %951
        %955 = vrot.lane.b32.xlu0 %v842, 16
        %v956 = vpop.permute.xlu0 %955
        %959 = vrot.lane.b32.xlu0 %v863, 24
        %v960 = vpop.permute.xlu0 %959
        %v962 = vsel %vm504, %v800, %v952
        %vm963 = vcmask 130048
        %v964 = vsel %vm963, %v962, %v956
        %vm965 = vcmask 195584
        %v966 = vsel %vm965, %v964, %v960
        %968 = vrot.lane.b32.xlu0 %v905, 8
        %v969 = vpop.permute.xlu0 %968
        %972 = vrot.lane.b32.xlu0 %v926, 16
        %v973 = vpop.permute.xlu0 %972
        %976 = vrot.lane.b32.xlu0 %v947, 24
        %v977 = vpop.permute.xlu0 %976
        %v979 = vsel %vm504, %v884, %v969
        %v980 = vsel %vm963, %v979, %v973
        %v981 = vsel %vm965, %v980, %v977
        %v982 = vpack.c.bf16 %v981, %v966
        %v983 = vld [vmem:[%s420] sm:$0xf]
        %v984 = vld [vmem:[%s420 + $0x4] sm:$0xf]
        %v985 = vld [vmem:[%s420 + $0x8] sm:$0xf]
        %v986 = vld [vmem:[%s420 + $0xc] sm:$0xf]
        %v987 = vperm.slane %v448, 1
        %v992 = vunpack.c.l.b16 %v983
        %v993 = vunpack.c.l.b16 %v984
        %v994 = vunpack.c.l.b16 %v985
        %v995 = vunpack.c.l.b16 %v986
        %v996 = vpack.c.b16 %v993, %v992
        %v997 = vpack.c.b16 %v995, %v994
        %v1001 = vsel %vm466, %v982, 0
        %1003 = vmatpush.bf16.msra.mxu0 0
        %1004 = vmatpush.bf16.msra.mxu0 0
        %1005 = vmatpush.bf16.msra.mxu0 0
        %1006 = vmatpush.bf16.msra.mxu0 0
        %1007 = vmatpush.bf16.msra.mxu0 0
        %1008 = vmatpush.bf16.msra.mxu0 0
        %1009 = vmatpush.bf16.msra.mxu0 %v997
        %1010 = vmatpush.bf16.msra.mxu0 %v996
        %1011 = vmatmul.bf16.gmra.mxu0 %v1001
        %v1012 = vpop.f32.mrf.mxu0
        %v1013 = vadd.f32 %v987, %v1012
        %v1014 = vpop.f32.mrf.mxu0
        %v1015 = vadd.f32 %v987, %v1014
        %1016 = vdwg.mxu0
        %v1017 = vadd.f32 %v445, %v1013
        %v1018 = vadd.f32 %v446, %v1015
        %v1019 = vsel %vm466, %v1017, 0.0
        %1020 = vadd.xlane.f32.xlu0 %v1019
        %v1021 = vpop.xlane.xlu0 %1020
        %v1022 = vsel %vm466, %v1018, 0.0
        %1023 = vadd.xlane.f32.xlu0 %v1022
        %v1024 = vpop.xlane.xlu0 %1023
        %v1025 = vrcp.pop 32.0
        %v1026 = vmul.f32 32.0, %v1025
        %v1027 = vsub.f32 1.0, %v1026
        %v1028 = vmul.f32 %v1025, %v1027
        %v1029 = vadd.f32 %v1025, %v1028
        %vm1030 = vweird.f32 %v1025
        %v1031 = vsel %vm1030, %v1025, %v1029
        %v1032 = vmul.f32 %v1021, %v1031
        %v1033 = vmul.f32 %v1024, %v1031
        %v1034 = vsub.f32 %v1017, %v1032
        %v1035 = vsub.f32 %v1018, %v1033
        %v1036 = vmul.f32 %v1034, %v1034
        %v1037 = vmul.f32 %v1035, %v1035
        %v1038 = vsel %vm466, %v1036, 0.0
        %1039 = vadd.xlane.f32.xlu0 %v1038
        %v1040 = vpop.xlane.xlu0 %1039
        %v1041 = vsel %vm466, %v1037, 0.0
        %1042 = vadd.xlane.f32.xlu0 %v1041
        %v1043 = vpop.xlane.xlu0 %1042
        %v1044 = vmul.f32 %v1040, %v1031
        %v1045 = vmul.f32 %v1043, %v1031
        %v1046 = vadd.f32 %v1044, 1e-05
        %v1047 = vadd.f32 %v1045, 1e-05
        %v1048 = vrsqrt.pop %v1046
        %v1049 = vmul.f32 %v1048, %v1046
        %v1050 = vmul.f32 %v1049, %v1048
        %v1051 = vmul.f32 0.5, %v1050
        %v1052 = vsub.f32 1.5, %v1051
        %v1053 = vmul.f32 %v1048, %v1052
        %vm1054 = vweird.f32 %v1046
        %vm1055 = vweird.f32 %v1048
        %vm1056 = vmor %vm1054, %vm1055
        %v1057 = vsel %vm1056, %v1048, %v1053
        %v1058 = vrsqrt.pop %v1047
        %v1059 = vmul.f32 %v1058, %v1047
        %v1060 = vmul.f32 %v1059, %v1058
        %v1061 = vmul.f32 0.5, %v1060
        %v1062 = vsub.f32 1.5, %v1061
        %v1063 = vmul.f32 %v1058, %v1062
        %vm1064 = vweird.f32 %v1047
        %vm1065 = vweird.f32 %v1058
        %vm1066 = vmor %vm1064, %vm1065
        %v1067 = vsel %vm1066, %v1058, %v1063
        %v1068 = vmul.f32 %v1034, %v1057
        %v1069 = vmul.f32 %v1035, %v1067
        %v1070 = vperm.slane %v448, 2
        %v1071 = vmul.f32 %v1068, %v1070
        %v1072 = vmul.f32 %v1069, %v1070
        %v1073 = vperm.slane %v448, 3
        %v1074 = vadd.f32 %v1071, %v1073
        %v1075 = vadd.f32 %v1072, %v1073
        %v1076 = vpack.c.bf16 %v1075, %v1074
        %v1077 = vld [vmem:[%s425] sm:$0xf]
        %v1078 = vld [vmem:[%s425 + $0x4] sm:$0xf]
        %v1079 = vld [vmem:[%s425 + $0x8] sm:$0xf]
        %v1080 = vld [vmem:[%s425 + $0xc] sm:$0xf]
        %v1081 = vperm.slane %v448, 4
        %v1086 = vunpack.c.l.b16 %v1077
        %v1087 = vunpack.c.l.b16 %v1078
        %v1088 = vunpack.c.l.b16 %v1079
        %v1089 = vunpack.c.l.b16 %v1080
        %v1090 = vpack.c.b16 %v1087, %v1086
        %v1091 = vpack.c.b16 %v1089, %v1088
        %v1095 = vsel %vm466, %v1076, 0
        %1097 = vmatpush.bf16.msra.mxu0 0
        %1098 = vmatpush.bf16.msra.mxu0 0
        %1099 = vmatpush.bf16.msra.mxu0 0
        %1100 = vmatpush.bf16.msra.mxu0 0
        %1101 = vmatpush.bf16.msra.mxu0 0
        %1102 = vmatpush.bf16.msra.mxu0 0
        %1103 = vmatpush.bf16.msra.mxu0 %v1091
        %1104 = vmatpush.bf16.msra.mxu0 %v1090
        %1105 = vmatmul.bf16.gmra.mxu0 %v1095
        %v1106 = vpop.f32.mrf.mxu0
        %v1107 = vadd.f32 %v1081, %v1106
        %v1108 = vpop.f32.mrf.mxu0
        %v1109 = vadd.f32 %v1081, %v1108
        %1110 = vdwg.mxu0
        %v1111 = vmax.f32 %v1107, 0.0
        %v1112 = vmax.f32 %v1109, 0.0
        %v1113 = vpack.c.bf16 %v1112, %v1111
        %v1114 = vld [vmem:[%s430] sm:$0xf]
        %v1115 = vld [vmem:[%s430 + $0x4] sm:$0xf]
        %v1116 = vld [vmem:[%s430 + $0x8] sm:$0xf]
        %v1117 = vld [vmem:[%s430 + $0xc] sm:$0xf]
        %v1118 = vld [vmem:[%s430 + $0x10] sm:$0xf]
        %v1119 = vld [vmem:[%s430 + $0x14] sm:$0xf]
        %v1120 = vld [vmem:[%s430 + $0x18] sm:$0xf]
        %v1121 = vld [vmem:[%s430 + $0x1c] sm:$0xf]
        %v1122 = vperm.slane %v448, 5
        %v1131 = vunpack.c.l.b16 %v1114
        %v1132 = vunpack.c.l.b16 %v1115
        %v1133 = vunpack.c.l.b16 %v1116
        %v1134 = vunpack.c.l.b16 %v1117
        %v1135 = vunpack.c.l.b16 %v1118
        %v1136 = vunpack.c.l.b16 %v1119
        %v1137 = vunpack.c.l.b16 %v1120
        %v1138 = vunpack.c.l.b16 %v1121
        %v1139 = vpack.c.b16 %v1132, %v1131
        %v1140 = vpack.c.b16 %v1134, %v1133
        %v1141 = vpack.c.b16 %v1136, %v1135
        %v1142 = vpack.c.b16 %v1138, %v1137
        %vm1147 = vcmask 523264
        %v1149 = vsel %vm1147, %v1113, 0
        %1151 = vmatpush.bf16.msra.mxu0 0
        %1152 = vmatpush.bf16.msra.mxu0 0
        %1153 = vmatpush.bf16.msra.mxu0 0
        %1154 = vmatpush.bf16.msra.mxu0 0
        %1155 = vmatpush.bf16.msra.mxu0 %v1142
        %1156 = vmatpush.bf16.msra.mxu0 %v1141
        %1157 = vmatpush.bf16.msra.mxu0 %v1140
        %1158 = vmatpush.bf16.msra.mxu0 %v1139
        %1159 = vmatmul.bf16.gmra.mxu0 %v1149
        %v1160 = vpop.f32.mrf.mxu0
        %v1161 = vadd.f32 %v1122, %v1160
        %v1162 = vpop.f32.mrf.mxu0
        %v1163 = vadd.f32 %v1122, %v1162
        %1164 = vdwg.mxu0
        %v1165 = vadd.f32 %v1074, %v1161
        %v1166 = vadd.f32 %v1075, %v1163
        %v1167 = vsel %vm466, %v1165, 0.0
        %1168 = vadd.xlane.f32.xlu0 %v1167
        %v1169 = vpop.xlane.xlu0 %1168
        %v1170 = vsel %vm466, %v1166, 0.0
        %1171 = vadd.xlane.f32.xlu0 %v1170
        %v1172 = vpop.xlane.xlu0 %1171
        %v1173 = vmul.f32 %v1169, %v1031
        %v1174 = vmul.f32 %v1172, %v1031
        %v1175 = vsub.f32 %v1165, %v1173
        %v1176 = vsub.f32 %v1166, %v1174
        %v1177 = vmul.f32 %v1175, %v1175
        %v1178 = vmul.f32 %v1176, %v1176
        %v1179 = vsel %vm466, %v1177, 0.0
        %1180 = vadd.xlane.f32.xlu0 %v1179
        %v1181 = vpop.xlane.xlu0 %1180
        %v1182 = vsel %vm466, %v1178, 0.0
        %1183 = vadd.xlane.f32.xlu0 %v1182
        %v1184 = vpop.xlane.xlu0 %1183
        %v1185 = vmul.f32 %v1181, %v1031
        %v1186 = vmul.f32 %v1184, %v1031
        %v1187 = vadd.f32 %v1185, 1e-05
        %v1188 = vadd.f32 %v1186, 1e-05
        %v1189 = vrsqrt.pop %v1187
        %v1190 = vmul.f32 %v1189, %v1187
        %v1191 = vmul.f32 %v1190, %v1189
        %v1192 = vmul.f32 0.5, %v1191
        %v1193 = vsub.f32 1.5, %v1192
        %v1194 = vmul.f32 %v1189, %v1193
        %vm1195 = vweird.f32 %v1187
        %vm1196 = vweird.f32 %v1189
        %vm1197 = vmor %vm1195, %vm1196
        %v1198 = vsel %vm1197, %v1189, %v1194
        %v1199 = vrsqrt.pop %v1188
        %v1200 = vmul.f32 %v1199, %v1188
        %v1201 = vmul.f32 %v1200, %v1199
        %v1202 = vmul.f32 0.5, %v1201
        %v1203 = vsub.f32 1.5, %v1202
        %v1204 = vmul.f32 %v1199, %v1203
        %vm1205 = vweird.f32 %v1188
        %vm1206 = vweird.f32 %v1199
        %vm1207 = vmor %vm1205, %vm1206
        %v1208 = vsel %vm1207, %v1199, %v1204
        %v1209 = vmul.f32 %v1175, %v1198
        %v1210 = vmul.f32 %v1176, %v1208
        %v1211 = vperm.slane %v448, 6
        %v1212 = vmul.f32 %v1209, %v1211
        %v1213 = vmul.f32 %v1210, %v1211
        %v1214 = vperm.slane %v448, 7
        %v1215 = vadd.f32 %v1212, %v1214
        %v1216 = vadd.f32 %v1213, %v1214
        %1217 = vst.msk [vmem:[#allocation2] sm:$0xff] %vm466, %v1215
        %1218 = vst.msk [vmem:[#allocation2 + $0x8] sm:$0xff] %vm466, %v1216
        %p1219 = scmp.eq.s32.totalorder %s26, 1
        // Predicated region
        $region61: #{transformer_encoder_forward.1} parent=55 // pred_check
          %p1220 = pneg %p1219
        $region62: #{transformer_encoder_forward.1} parent=55 // pred_check_branch
          %1222 = sbr.rel (%p1220) target = $region64
        $region63: #{transformer_encoder_forward.1} parent=55 // pred_region
          %v1223 = vld [vmem:[%s6] sm:$0x1]
          %v1224 = vld [vmem:[%s6 + $0x1] sm:$0x1]
          %v1225 = vsel %vm466, %v1215, 0.0
          %1226 = vadd.xlane.f32.xlu0 %v1225
          %v1227 = vpop.xlane.xlu0 %1226
          %v1228 = vsel %vm466, %v1216, 0.0
          %1229 = vadd.xlane.f32.xlu0 %v1228
          %v1230 = vpop.xlane.xlu0 %1229
          %v1231 = vmul.f32 %v1227, %v1031
          %v1232 = vmul.f32 %v1230, %v1031
          %v1233 = vsub.f32 %v1215, %v1231
          %v1234 = vsub.f32 %v1216, %v1232
          %v1235 = vmul.f32 %v1233, %v1233
          %v1236 = vmul.f32 %v1234, %v1234
          %v1237 = vsel %vm466, %v1235, 0.0
          %1238 = vadd.xlane.f32.xlu0 %v1237
          %v1239 = vpop.xlane.xlu0 %1238
          %v1240 = vsel %vm466, %v1236, 0.0
          %1241 = vadd.xlane.f32.xlu0 %v1240
          %v1242 = vpop.xlane.xlu0 %1241
          %v1243 = vmul.f32 %v1239, %v1031
          %v1244 = vmul.f32 %v1242, %v1031
          %v1245 = vadd.f32 %v1243, 1e-05
          %v1246 = vadd.f32 %v1244, 1e-05
          %v1247 = vrsqrt.pop %v1245
          %v1248 = vmul.f32 %v1247, %v1245
          %v1249 = vmul.f32 %v1248, %v1247
          %v1250 = vmul.f32 0.5, %v1249
          %v1251 = vsub.f32 1.5, %v1250
          %v1252 = vmul.f32 %v1247, %v1251
          %vm1253 = vweird.f32 %v1245
          %vm1254 = vweird.f32 %v1247
          %vm1255 = vmor %vm1253, %vm1254
          %v1256 = vsel %vm1255, %v1247, %v1252
          %v1257 = vrsqrt.pop %v1246
          %v1258 = vmul.f32 %v1257, %v1246
          %v1259 = vmul.f32 %v1258, %v1257
          %v1260 = vmul.f32 0.5, %v1259
          %v1261 = vsub.f32 1.5, %v1260
          %v1262 = vmul.f32 %v1257, %v1261
          %vm1263 = vweird.f32 %v1246
          %vm1264 = vweird.f32 %v1257
          %vm1265 = vmor %vm1263, %vm1264
          %v1266 = vsel %vm1265, %v1257, %v1262
          %v1267 = vmul.f32 %v1233, %v1256
          %v1268 = vmul.f32 %v1234, %v1266
          %v1269 = vperm.slane %v1223, 0
          %v1270 = vmul.f32 %v1267, %v1269
          %v1271 = vmul.f32 %v1268, %v1269
          %v1272 = vperm.slane %v1224, 0
          %v1273 = vadd.f32 %v1270, %v1272
          %v1274 = vadd.f32 %v1271, %v1272
          %v1275 = vsel %vm466, %v1273, 0.0
          %v1276 = vrot.slane %v1275, 4
          %v1277 = vadd.f32 %v1275, %v1276
          %v1278 = vrot.slane %v1277, 2
          %v1279 = vadd.f32 %v1277, %v1278
          %v1280 = vrot.slane %v1279, 1
          %v1281 = vadd.f32 %v1279, %v1280
          %v1282 = vsel %vm466, %v1274, 0.0
          %v1283 = vrot.slane %v1282, 4
          %v1284 = vadd.f32 %v1282, %v1283
          %v1285 = vrot.slane %v1284, 2
          %v1286 = vadd.f32 %v1284, %v1285
          %v1287 = vrot.slane %v1286, 1
          %v1288 = vadd.f32 %v1286, %v1287
          %v1289 = vrcp.pop 8.0
          %v1290 = vmul.f32 8.0, %v1289
          %v1291 = vsub.f32 1.0, %v1290
          %v1292 = vmul.f32 %v1289, %v1291
          %v1293 = vadd.f32 %v1289, %v1292
          %vm1294 = vweird.f32 %v1289
          %v1295 = vsel %vm1294, %v1289, %v1293
          %v1296 = vmul.f32 %v1281, %v1295
          %v1297 = vmul.f32 %v1288, %v1295
          %v1298 = vpack.c.bf16 %v1296, %v1296
          %v1299 = vpack.c.bf16 %v1297, %v1297
          %v1300 = vld [vmem:[%s7] sm:$0xf]
          %v1301 = vld [vmem:[%s7 + $0x4] sm:$0xf]
          %v1302 = vld [vmem:[%s7 + $0x8] sm:$0xf]
          %v1303 = vld [vmem:[%s7 + $0xc] sm:$0xf]
          %v1304 = vld [vmem:[%s8] sm:$0x1]
          %v1306 = vperm.slane %v1304, 0
          %v1310 = vunpack.c.l.b16 %v1298
          %v1311 = vunpack.c.l.b16 %v1299
          %vm1312 = vcmask 1041409
          %v1313 = vsel %vm1312, %v1311, %v1310
          %v1314 = vpack.c.b16 %v1313, %v1313
          %v1319 = vunpack.c.l.b16 %v1300
          %v1320 = vunpack.c.l.b16 %v1301
          %v1321 = vunpack.c.l.b16 %v1302
          %v1322 = vunpack.c.l.b16 %v1303
          %v1323 = vpack.c.b16 %v1320, %v1319
          %v1324 = vpack.c.b16 %v1322, %v1321
          %v1328 = vsel %vm466, %v1314, 0
          %1330 = vmatpush.bf16.msra.mxu0 0
          %1331 = vmatpush.bf16.msra.mxu0 0
          %1332 = vmatpush.bf16.msra.mxu0 0
          %1333 = vmatpush.bf16.msra.mxu0 0
          %1334 = vmatpush.bf16.msra.mxu0 0
          %1335 = vmatpush.bf16.msra.mxu0 0
          %1336 = vmatpush.bf16.msra.mxu0 %v1324
          %1337 = vmatpush.bf16.msra.mxu0 %v1323
          %1338 = vmatmul.bf16.gmra.mxu0 %v1328
          %v1339 = vpop.f32.mrf.mxu0
          %v1340 = vadd.f32 %v1306, %v1339
          %v1341 = vpop.f32.mrf.mxu0
          %1342 = vdwg.mxu0
          %1343 = vst [vmem:[#allocation3] sm:$0x3] %v1340
        $region64: #{transformer_encoder_forward.1} parent=55 // pred_fallthru
          _
        // Predicated region
        $region65: #{transformer_encoder_forward.1} parent=55 // pred_check
          %p1344 = pneg %p270
        $region66: #{transformer_encoder_forward.1} parent=55 // pred_check_branch
          %1346 = sbr.rel (%p1344) target = $region68
        $region67: #{transformer_encoder_forward.1} parent=55 // pred_region
          %1348 = vsyncadd [#allocation4], 0
          %s1349 = smul.addr %s25, 2
          %s1350 = scalar_lea.hbm %s9, %s1349
          %s1352 = sshll.u32 [#allocation3], 4
          %s1353 = int_to_ptr.vmem [resolvable:$true] %s1352
          %s1354 = sshll.u32 %s1350, 4
          %s1355 = int_to_ptr.hbm [resolvable:$true] %s1354
          %1357 = dma.vmem_to_hbm [thread:$0]  %s1353, 32, %s1355, [#allocation4]
        $region68: #{transformer_encoder_forward.1} parent=55 // pred_fallthru
          _
        // Predicated region
        $region69: #{transformer_encoder_forward.1} parent=55 // pred_check
          %p1358 = pneg %p270
        $region70: #{transformer_encoder_forward.1} parent=55 // pred_check_branch
          %1360 = sbr.rel (%p1358) target = $region72
        $region71: #{transformer_encoder_forward.1} parent=55 // pred_region
          %1362 = dma.done [#allocation4], 32
        $region72: #{transformer_encoder_forward.1} parent=55 // pred_fallthru
          _
      $region56: #{transformer_encoder_forward.1} parent=5 // pred_fallthru
        _
      %p1363 = scmp.le.s32.totalorder 2, %s16
      // Predicated region
      $region73: #{transformer_encoder_forward.1} parent=5 // pred_check
        %p1364 = pneg %p1363
      $region74: #{transformer_encoder_forward.1} parent=5 // pred_check_branch
        %1366 = sbr.rel (%p1364) target = $region76
      $region75: #{transformer_encoder_forward.1} parent=5 // pred_region
        %s1367 = ssub.s32 %s16, 2
      $region76: #{transformer_encoder_forward.1} parent=5 // pred_fallthru
        _
    $region6: #{transformer_encoder_forward.1} parent=1 // loop_footer
      %s20 = sadd.s32 1, %s16
    $region7: #{transformer_encoder_forward.1} parent=1 // loop_footer_branch
      %15 = sbr.rel target = $region3
    $region8: #{transformer_encoder_forward.1} parent=1 // loop_exit
      _
    %1368 = vsyncpa [#allocation4], 1
    %s1369 = scalar_lea.sflag [#allocation4], 1
    %1370 = vsyncpa %s1369, 1

</llo_original>
